<compile_context>
chip_gen: v7x
topology: tpu7x:2x2x1
jax: 0.10.0
libtpu: 0.0.40
codegen_flags: <defaults>
</compile_context>

<pallas_src>
import jax
import jax.numpy as jnp
from jax.experimental import pallas as pl
from jax.experimental.pallas import tpu as pltpu

LN_EPS = 1e-5   # torch.nn.LayerNorm default
LANE = 128      # TPU vreg lane width


def _round_up(x, m):
    return ((x + m - 1) // m) * m


def _mxu_lane_target():
    """256-lane packing on 256x256-MXU generations (v6e/v7x), else 128."""
    try:
        kind = jax.devices()[0].device_kind.lower()
    except Exception:
        return 128
    for tag in ("v2", "v3", "v4", "v5"):
        if tag in kind:
            return 128
    return 256


# ---------------------------------------------------------------------------
# Kernel
# ---------------------------------------------------------------------------
def _make_kernel(num_linear, n_widths, d_out_f, matmul_dtype):
    """Fused (row-folded) MLP + grouped-LayerNorm kernel.

    Kernel refs:
      sel_ref : int32[num_blocks] scalar-prefetch (SMEM); param set per block.
      x_ref   : (block_rows, d_in_f)           bf16 input tile (rows folded
                                               into lanes)
      w_l     : (S, k_f_l, n_f_l) * num_linear resident folded weights; the
                                               last one is augmented with
                                               mean columns (W@Avg).
      vec_ref : (S, rows_pad, vec_width)       packed biases + gamma + beta
      avg_ref : (d_out_f, d_out_f)             block-diag 1/d_out (bf16)
      out_ref : (block_rows, d_out_f)          bf16 output tile (full-lane)
    """

    def kernel(sel_ref, x_ref, *refs):
        out_ref, avg_ref, vec_ref = refs[-1], refs[-2], refs[-3]
        w_refs = refs[:-3]
        sel = sel_ref[pl.program_id(0)]           # node set (0) or edge set (1)

        vec = vec_ref[sel]                        # (rows_pad, vec_width) f32
        h = x_ref[...]                            # bf16 folded input tile
        for l in range(num_linear):
            w = w_refs[l][sel]                    # (k_f_l, n_f_l) bf16
            b = vec[l:l + 1, :n_widths[l]]        # (1, n_f_l) f32
            h = jnp.dot(h.astype(matmul_dtype), w,
                        preferred_element_type=jnp.float32) + b
            if l < num_linear - 1:                # ReLU on all but last Linear
                h = jnp.maximum(h, 0.0)

        # The last matmul already produced [ value | per-group mean ] because
        # its weight/bias were augmented with W@Avg / b@Avg columns.  Each
        # fold-group of d_out lanes is normalized independently (Avg is
        # block-diagonal), so everything stays lane-dense and reshape-free.
        val = h[:, :d_out_f]
        mean = h[:, d_out_f:]
        cen = val - mean
        var = jnp.dot((cen * cen).astype(matmul_dtype), avg_ref[...],
                      preferred_element_type=jnp.float32)
        gamma = vec[num_linear:num_linear + 1, :d_out_f]
        beta = vec[num_linear + 1:num_linear + 2, :d_out_f]
        y = cen * jax.lax.rsqrt(var + LN_EPS) * gamma + beta
        out_ref[...] = y.astype(out_ref.dtype)

    return kernel


# ---------------------------------------------------------------------------
# Parameter folding / packing
# ---------------------------------------------------------------------------
def _fold_weight(w, fold, pad_in=None):
    """Zero-pad the input dim to pad_in, then block-diagonalize `fold` copies."""
    if pad_in is not None and pad_in > w.shape[0]:
        w = jnp.pad(w, ((0, pad_in - w.shape[0]), (0, 0)))
    if fold == 1:
        return w
    return jnp.kron(jnp.eye(fold, dtype=w.dtype), w)


def _fold_vec(v, fold, width=None):
    """Tile a (1, n) row vector `fold` times along lanes, zero-pad to width."""
    if fold > 1:
        v = jnp.tile(v, (1, fold))
    if width is not None and v.shape[1] < width:
        v = jnp.pad(v, ((0, 0), (0, width - v.shape[1])))
    return v


def _pack_param_sets(param_sets, in_dims, d_out, matmul_dtype, lane_target):
    """Fold + stack several (weights, biases, gamma, beta) MLP+LN param sets."""
    num_linear = len(param_sets[0][0])
    out_widths = [w.shape[1] for w in param_sets[0][0]]
    assert out_widths[-1] == d_out
    d_in_pad = max(in_dims)

    # Pack `fold` logical rows side-by-side along lanes so matmul N and the
    # output stores use the full MXU width / vreg lanes of this generation.
    if d_out < lane_target and lane_target % d_out == 0:
        fold = lane_target // d_out
    elif d_out < LANE and LANE % d_out == 0:
        fold = LANE // d_out
    else:
        fold = 1   # TODO(synk): d_out not dividing 128 -> masked 32-lane stores.

    d_in_f = fold * d_in_pad
    d_out_f = fold * d_out

    # Block-diagonal group-averaging matrix: f32 for weight augmentation,
    # matmul_dtype copy for the in-kernel variance matmul (1/d_out is exact in
    # bf16 when d_out is a power of two).
    avg_f = jnp.kron(jnp.eye(fold, dtype=jnp.float32),
                     jnp.full((d_out, d_out), 1.0 / d_out, jnp.float32))

    n_widths = []
    for l in range(num_linear):
        n = fold * out_widths[l]
        if l == num_linear - 1:
            n *= 2                         # value columns + mean columns
        n_widths.append(n)
    vec_width = max(max(n_widths), d_out_f)
    vec_rows = _round_up(num_linear + 2, 8)   # sublane-friendly padding

    w_stacks = []
    for l in range(num_linear):
        per_set = []
        for weights, _, _, _ in param_sets:
            pad_in = d_in_pad if l == 0 else None
            wf = _fold_weight(weights[l], fold, pad_in)          # f32
            if l == num_linear - 1:
                wf = jnp.concatenate([wf, wf @ avg_f], axis=1)   # mean columns
            per_set.append(wf.astype(matmul_dtype))
        w_stacks.append(jnp.stack(per_set))                      # (S, k_f, n_f)

    vec_sets = []
    for weights, biases, gamma, beta in param_sets:
        rows = []
        for l in range(num_linear):
            bf = _fold_vec(biases[l], fold)
            if l == num_linear - 1:
                bf = jnp.concatenate([bf, bf @ avg_f], axis=1)
            rows.append(_fold_vec(bf, 1, vec_width))
        rows.append(_fold_vec(gamma, fold, vec_width))
        rows.append(_fold_vec(beta, fold, vec_width))
        v = jnp.concatenate(rows, axis=0)                        # (L+2, vec_w)
        v = jnp.pad(v, ((0, vec_rows - v.shape[0]), (0, 0)))
        vec_sets.append(v)
    vec_stack = jnp.stack(vec_sets)                              # (S, rows, vec_w)

    return dict(num_linear=num_linear, fold=fold, d_in_pad=d_in_pad,
                d_in_f=d_in_f, d_out=d_out, d_out_f=d_out_f,
                n_widths=tuple(n_widths), w_stacks=w_stacks,
                vec_stack=vec_stack, avg=avg_f.astype(matmul_dtype),
                matmul_dtype=matmul_dtype)


# ---------------------------------------------------------------------------
# Pallas wrapper: one fused call over one or more row-sets
# ---------------------------------------------------------------------------
def _run_packed(packed, xs, *, block_rows_cap=512, out_dtype=jnp.bfloat16):
    """Run the fused MLP+LayerNorm over one or more row-sets in ONE pallas_call."""
    fold = packed["fold"]
    d_in_pad, d_in_f = packed["d_in_pad"], packed["d_in_f"]
    d_out, d_out_f = packed["d_out"], packed["d_out_f"]
    mm_dtype = packed["matmul_dtype"]

    # Adaptive tile size: large by default (amortizes ~0.35us/step pipeline
    # overhead, keeps DMAs near the HBM roofline) but clamped so small graphs
    # are not padded past one block per section.  With node + edge sections
    # the grid always has >= 2 blocks, so both v7x TensorCores get work.
    max_folded = max(pl.cdiv(x.shape[0], fold) for x in xs)
    block_rows = min(block_rows_cap, _round_up(max(max_folded, 8), 8))
    rows_per_block = fold * block_rows

    sections, sel_chunks, n_rows = [], [], []
    for s, x in enumerate(xs):
        n, d_in = x.shape
        n_rows.append(n)
        n_blocks = max(1, pl.cdiv(n, rows_per_block))
        n_pad = n_blocks * rows_per_block
        # One fused cast+pad+reshape per section; input stored in bf16 since
        # the matmul consumes bf16 anyway (halves input HBM->VMEM bytes).
        xp = jnp.pad(x.astype(mm_dtype), ((0, n_pad - n), (0, d_in_pad - d_in)))
        sections.append(xp.reshape(n_blocks * block_rows, d_in_f))
        sel_chunks.append(jnp.full((n_blocks,), s, jnp.int32))
    x_cat = jnp.concatenate(sections, axis=0)
    sel = jnp.concatenate(sel_chunks, axis=0)
    num_blocks = x_cat.shape[0] // block_rows

    # Parameters (<~1 MiB total for both sets) stay resident in VMEM via
    # constant index maps; the param set is selected in-kernel from the
    # prefetched SMEM scalar -> no per-step, sel-driven weight DMAs.
    in_specs = [pl.BlockSpec((block_rows, d_in_f), lambda i, sel_ref: (i, 0))]
    for w in packed["w_stacks"]:
        in_specs.append(pl.BlockSpec(w.shape, lambda i, sel_ref: (0, 0, 0)))
    in_specs.append(pl.BlockSpec(packed["vec_stack"].shape,
                                 lambda i, sel_ref: (0, 0, 0)))
    in_specs.append(pl.BlockSpec(packed["avg"].shape,
                                 lambda i, sel_ref: (0, 0)))

    kernel = _make_kernel(packed["num_linear"], packed["n_widths"], d_out_f,
                          mm_dtype)

    out = pl.pallas_call(
        kernel,
        out_shape=jax.ShapeDtypeStruct((num_blocks * block_rows, d_out_f),
                                       out_dtype),
        grid_spec=pltpu.PrefetchScalarGridSpec(
            num_scalar_prefetch=1,
            grid=(num_blocks,),
            in_specs=in_specs,
            out_specs=pl.BlockSpec((block_rows, d_out_f),
                                   lambda i, sel_ref: (i, 0)),
        ),
        compiler_params=pltpu.CompilerParams(
            dimension_semantics=("parallel",)),
    )(sel, x_cat, *packed["w_stacks"], packed["vec_stack"], packed["avg"])

    # Un-fold and trim each section back to its logical [n, d_out] shape
    # (row-major-compatible reshape; no transpose).
    outs, offset = [], 0
    for s, n in enumerate(n_rows):
        n_blocks = sel_chunks[s].shape[0]
        blk = out[offset:offset + n_blocks * block_rows]
        offset += n_blocks * block_rows
        outs.append(blk.reshape(n_blocks * rows_per_block, d_out)[:n])
    return outs


# ---------------------------------------------------------------------------
# Parameter init (PyTorch defaults) and the Encoder module
# ---------------------------------------------------------------------------
def _init_linear(key, fan_in, fan_out):
    """PyTorch nn.Linear default init: U(-1/sqrt(fan_in), 1/sqrt(fan_in))."""
    kw, kb = jax.random.split(key)
    bound = 1.0 / jnp.sqrt(jnp.float32(fan_in))
    # stored as [in, out] (transposed vs PyTorch) for x @ W
    w = jax.random.uniform(kw, (fan_in, fan_out), jnp.float32, -bound, bound)
    b = jax.random.uniform(kb, (1, fan_out), jnp.float32, -bound, bound)
    return w, b


def init_mlp_ln_params(key, in_size, hidden, num_hidden_layers, out_size):
    """Parameters for build_mlp(in, [hidden]*L, out) + LayerNorm(out)."""
    sizes = [in_size] + [hidden] * num_hidden_layers + [out_size]
    weights, biases = [], []
    for i in range(len(sizes) - 1):
        key, sub = jax.random.split(key)
        w, b = _init_linear(sub, sizes[i], sizes[i + 1])
        weights.append(w)
        biases.append(b)
    gamma = jnp.ones((1, out_size), jnp.float32)
    beta = jnp.zeros((1, out_size), jnp.float32)
    return weights, biases, gamma, beta


class EncoderPallas:
    """Pallas equivalent of the PyTorch Encoder module."""

    def __init__(self, node_in, node_out, edge_in, edge_out,
                 mlp_num_layers, mlp_hidden_dim, key, *,
                 block_rows_cap=512, matmul_dtype=jnp.bfloat16,
                 out_dtype=jnp.bfloat16, lane_target=None):
        # out_dtype defaults to bf16 (what the downstream Processor consumes);
        # pass jnp.float32 for dtype parity with the PyTorch module.
        self.block_rows_cap = block_rows_cap
        self.matmul_dtype = matmul_dtype
        self.out_dtype = out_dtype
        lane_target = lane_target or _mxu_lane_target()
        k_node, k_edge = jax.random.split(key)
        self.node_params = init_mlp_ln_params(
            k_node, node_in, mlp_hidden_dim, mlp_num_layers, node_out)
        self.edge_params = init_mlp_ln_params(
            k_edge, edge_in, mlp_hidden_dim, mlp_num_layers, edge_out)
        self._fused = node_out == edge_out
        if self._fused:
            self._packed = _pack_param_sets(
                [self.node_params, self.edge_params], (node_in, edge_in),
                node_out, matmul_dtype, lane_target)
        else:
            # TODO(synk): differing node/edge output widths fall back to two calls.
            self._packed_node = _pack_param_sets(
                [self.node_params], (node_in,), node_out, matmul_dtype,
                lane_target)
            self._packed_edge = _pack_param_sets(
                [self.edge_params], (edge_in,), edge_out, matmul_dtype,
                lane_target)

    def __call__(self, x, edge_index, e_features):
        del edge_index  # unused by Encoder.forward (routed onwards upstream)
        if self._fused:
            node_lat, edge_lat = _run_packed(
                self._packed, [x, e_features],
                block_rows_cap=self.block_rows_cap, out_dtype=self.out_dtype)
        else:
            (node_lat,) = _run_packed(self._packed_node, [x],
                                      block_rows_cap=self.block_rows_cap,
                                      out_dtype=self.out_dtype)
            (edge_lat,) = _run_packed(self._packed_edge, [e_features],
                                      block_rows_cap=self.block_rows_cap,
                                      out_dtype=self.out_dtype)
        return node_lat, edge_lat


# ---------------------------------------------------------------------------
# Pure-JAX references
# ---------------------------------------------------------------------------
def _reference(x, params, matmul_dtype=None):
    """Pure-JAX reference (optionally mirroring the bf16 matmul operands)."""
    weights, biases, gamma, beta = params
    h = x.astype(jnp.float32)
    for i, (w, b) in enumerate(zip(weights, biases)):
        if matmul_dtype is not None and matmul_dtype != jnp.float32:
            h = jnp.dot(h.astype(matmul_dtype), w.astype(matmul_dtype),
                        preferred_element_type=jnp.float32) + b
        else:
            h = h @ w + b
        if i < len(weights) - 1:
            h = jnp.maximum(h, 0.0)
    mean = jnp.mean(h, axis=-1, keepdims=True)
    var = jnp.mean((h - mean) ** 2, axis=-1, keepdims=True)
    return (h - mean) * jax.lax.rsqrt(var + LN_EPS) * gamma + beta


if __name__ == "__main__":
    key = jax.random.PRNGKey(0)
    k_param, k_x, k_e, k_idx = jax.random.split(key, 4)

    # Small, module-consistent shapes.  Row counts are deliberately NOT
    # multiples of the tile size to exercise the padding/trim path.
    NODE_IN, NODE_OUT = 16, 32
    EDGE_IN, EDGE_OUT = 16, 32
    MLP_NUM_LAYERS, MLP_HIDDEN = 2, 32
    N_NODES, N_EDGES = 130, 250

    enc = EncoderPallas(NODE_IN, NODE_OUT, EDGE_IN, EDGE_OUT,
                        MLP_NUM_LAYERS, MLP_HIDDEN, k_param)

    x = jax.random.normal(k_x, (N_NODES, NODE_IN), jnp.float32)
    e_features = jax.random.normal(k_e, (N_EDGES, EDGE_IN), jnp.float32)
    edge_index = jax.random.randint(k_idx, (2, N_EDGES), 0, N_NODES, jnp.int32)

    node_lat, edge_lat = enc(x, edge_index, e_features)
    jax.block_until_ready((node_lat, edge_lat))

    assert node_lat.shape == (N_NODES, NODE_OUT)
    assert edge_lat.shape == (N_EDGES, EDGE_OUT)

    node_f32 = node_lat.astype(jnp.float32)
    edge_f32 = edge_lat.astype(jnp.float32)
    assert bool(jnp.all(jnp.isfinite(node_f32)))
    assert bool(jnp.all(jnp.isfinite(edge_f32)))

    # Check against a reference mirroring the bf16 matmul operands (kernel
    # additionally uses bf16 LN stats + bf16 output, hence the tolerance).
    ref_node_mm = _reference(x, enc.node_params, matmul_dtype=enc.matmul_dtype)
    ref_edge_mm = _reference(e_features, enc.edge_params,
                             matmul_dtype=enc.matmul_dtype)
    assert jnp.allclose(node_f32, ref_node_mm, atol=5e-2, rtol=5e-2)
    assert jnp.allclose(edge_f32, ref_edge_mm, atol=5e-2, rtol=5e-2)

    # Looser check against exact float32 PyTorch semantics (bf16 drift).
    ref_node = _reference(x, enc.node_params)
    ref_edge = _reference(e_features, enc.edge_params)
    assert jnp.allclose(node_f32, ref_node, atol=1e-1, rtol=1e-1)
    assert jnp.allclose(edge_f32, ref_edge, atol=1e-1, rtol=1e-1)

    print("KERNEL_OK")
</pallas_src>

<mosaic_0001>
module attributes {stable_mosaic.version = 11 : i64} {
  func.func @kernel(%arg0: i32, %arg1: memref<2xi32, #tpu.memory_space<smem>>, %arg2: memref<32x128xbf16, #tpu.memory_space<vmem>>, %arg3: memref<2x128x256xbf16, #tpu.memory_space<vmem>>, %arg4: memref<2x256x256xbf16, #tpu.memory_space<vmem>>, %arg5: memref<2x256x512xbf16, #tpu.memory_space<vmem>>, %arg6: memref<2x8x512xf32, #tpu.memory_space<vmem>>, %arg7: memref<256x256xbf16, #tpu.memory_space<vmem>>, %arg8: memref<32x256xbf16, #tpu.memory_space<vmem>>) attributes {dimension_semantics = [#tpu.dimension_semantics<parallel>], iteration_bounds = array<i64: 2>, scalar_prefetch = 1 : i64, scratch_operands = 0 : i64, tpu.core_type = #tpu.core_type<tc>, window_params = [{transform_indices = @transform_0, window_bounds = array<i64: 32, 128>}, {pipeline_mode = #tpu.pipeline_mode<synchronous>, transform_indices = @transform_1, window_bounds = array<i64: 2, 128, 256>}, {pipeline_mode = #tpu.pipeline_mode<synchronous>, transform_indices = @transform_2, window_bounds = array<i64: 2, 256, 256>}, {pipeline_mode = #tpu.pipeline_mode<synchronous>, transform_indices = @transform_3, window_bounds = array<i64: 2, 256, 512>}, {pipeline_mode = #tpu.pipeline_mode<synchronous>, transform_indices = @transform_4, window_bounds = array<i64: 2, 8, 512>}, {pipeline_mode = #tpu.pipeline_mode<synchronous>, transform_indices = @transform_5, window_bounds = array<i64: 256, 256>}, {transform_indices = @transform_6, window_bounds = array<i64: 32, 256>}]} {
    %0 = arith.index_cast %arg0 : i32 to index
    %1 = memref.load %arg1[%0] : memref<2xi32, #tpu.memory_space<smem>>
    %2 = arith.index_cast %1 : i32 to index
    %c0 = arith.constant 0 : index
    %c0_0 = arith.constant 0 : index
    %3 = vector.load %arg6[%2, %c0, %c0_0] : memref<2x8x512xf32, #tpu.memory_space<vmem>>, vector<1x8x512xf32>
    %4 = vector.shape_cast %3 : vector<1x8x512xf32> to vector<8x512xf32>
    %c0_1 = arith.constant 0 : index
    %c0_2 = arith.constant 0 : index
    %5 = vector.load %arg2[%c0_1, %c0_2] : memref<32x128xbf16, #tpu.memory_space<vmem>>, vector<32x128xbf16>
    %6 = arith.index_cast %1 : i32 to index
    %c0_3 = arith.constant 0 : index
    %c0_4 = arith.constant 0 : index
    %7 = vector.load %arg3[%6, %c0_3, %c0_4] : memref<2x128x256xbf16, #tpu.memory_space<vmem>>, vector<1x128x256xbf16>
    %8 = vector.shape_cast %7 : vector<1x128x256xbf16> to vector<128x256xbf16>
    %9 = vector.extract_strided_slice %4 {offsets = [0, 0], sizes = [1, 256], strides = [1, 1]} : vector<8x512xf32> to vector<1x256xf32>
    %cst = arith.constant dense<0.000000e+00> : vector<32x256xf32>
    %10 = tpu.matmul %5, %8, %cst {dimension_numbers = #tpu.dot_dimension_numbers<[1], [0], [0], [1], [0, 0, 1, 1], [], []>} : vector<32x128xbf16>, vector<128x256xbf16>, vector<32x256xf32> -> vector<32x256xf32>
    %11 = vector.broadcast %9 : vector<1x256xf32> to vector<32x256xf32>
    %12 = arith.addf %10, %11 : vector<32x256xf32>
    %cst_5 = arith.constant 0.000000e+00 : f32
    %13 = vector.broadcast %cst_5 : f32 to vector<32x256xf32>
    %14 = arith.maximumf %12, %13 : vector<32x256xf32>
    %15 = arith.index_cast %1 : i32 to index
    %c0_6 = arith.constant 0 : index
    %c0_7 = arith.constant 0 : index
    %16 = vector.load %arg4[%15, %c0_6, %c0_7] : memref<2x256x256xbf16, #tpu.memory_space<vmem>>, vector<1x256x256xbf16>
    %17 = vector.shape_cast %16 : vector<1x256x256xbf16> to vector<256x256xbf16>
    %18 = vector.extract_strided_slice %4 {offsets = [1, 0], sizes = [1, 256], strides = [1, 1]} : vector<8x512xf32> to vector<1x256xf32>
    %19 = arith.truncf %14 : vector<32x256xf32> to vector<32x256xbf16>
    %cst_8 = arith.constant dense<0.000000e+00> : vector<32x256xf32>
    %20 = tpu.matmul %19, %17, %cst_8 {dimension_numbers = #tpu.dot_dimension_numbers<[1], [0], [0], [1], [0, 0, 1, 1], [], []>} : vector<32x256xbf16>, vector<256x256xbf16>, vector<32x256xf32> -> vector<32x256xf32>
    %21 = vector.broadcast %18 : vector<1x256xf32> to vector<32x256xf32>
    %22 = arith.addf %20, %21 : vector<32x256xf32>
    %cst_9 = arith.constant 0.000000e+00 : f32
    %23 = vector.broadcast %cst_9 : f32 to vector<32x256xf32>
    %24 = arith.maximumf %22, %23 : vector<32x256xf32>
    %25 = arith.index_cast %1 : i32 to index
    %c0_10 = arith.constant 0 : index
    %c0_11 = arith.constant 0 : index
    %26 = vector.load %arg5[%25, %c0_10, %c0_11] : memref<2x256x512xbf16, #tpu.memory_space<vmem>>, vector<1x256x512xbf16>
    %27 = vector.shape_cast %26 : vector<1x256x512xbf16> to vector<256x512xbf16>
    %28 = vector.extract_strided_slice %4 {offsets = [2, 0], sizes = [1, 512], strides = [1, 1]} : vector<8x512xf32> to vector<1x512xf32>
    %29 = arith.truncf %24 : vector<32x256xf32> to vector<32x256xbf16>
    %cst_12 = arith.constant dense<0.000000e+00> : vector<32x512xf32>
    %30 = tpu.matmul %29, %27, %cst_12 {dimension_numbers = #tpu.dot_dimension_numbers<[1], [0], [0], [1], [0, 0, 1, 1], [], []>} : vector<32x256xbf16>, vector<256x512xbf16>, vector<32x512xf32> -> vector<32x512xf32>
    %31 = vector.broadcast %28 : vector<1x512xf32> to vector<32x512xf32>
    %32 = arith.addf %30, %31 : vector<32x512xf32>
    %33 = vector.extract_strided_slice %32 {offsets = [0, 0], sizes = [32, 256], strides = [1, 1]} : vector<32x512xf32> to vector<32x256xf32>
    %34 = vector.extract_strided_slice %32 {offsets = [0, 256], sizes = [32, 256], strides = [1, 1]} : vector<32x512xf32> to vector<32x256xf32>
    %35 = arith.subf %33, %34 : vector<32x256xf32>
    %36 = arith.mulf %35, %35 : vector<32x256xf32>
    %37 = arith.truncf %36 : vector<32x256xf32> to vector<32x256xbf16>
    %c0_13 = arith.constant 0 : index
    %c0_14 = arith.constant 0 : index
    %38 = vector.load %arg7[%c0_13, %c0_14] : memref<256x256xbf16, #tpu.memory_space<vmem>>, vector<256x256xbf16>
    %cst_15 = arith.constant dense<0.000000e+00> : vector<32x256xf32>
    %39 = tpu.matmul %37, %38, %cst_15 {dimension_numbers = #tpu.dot_dimension_numbers<[1], [0], [0], [1], [0, 0, 1, 1], [], []>} : vector<32x256xbf16>, vector<256x256xbf16>, vector<32x256xf32> -> vector<32x256xf32>
    %40 = vector.extract_strided_slice %4 {offsets = [3, 0], sizes = [1, 256], strides = [1, 1]} : vector<8x512xf32> to vector<1x256xf32>
    %41 = vector.extract_strided_slice %4 {offsets = [4, 0], sizes = [1, 256], strides = [1, 1]} : vector<8x512xf32> to vector<1x256xf32>
    %cst_16 = arith.constant 9.99999974E-6 : f32
    %42 = vector.broadcast %cst_16 : f32 to vector<32x256xf32>
    %43 = arith.addf %39, %42 : vector<32x256xf32>
    %44 = math.rsqrt %43 : vector<32x256xf32>
    %45 = arith.mulf %35, %44 : vector<32x256xf32>
    %46 = vector.broadcast %40 : vector<1x256xf32> to vector<32x256xf32>
    %47 = arith.mulf %45, %46 : vector<32x256xf32>
    %48 = vector.broadcast %41 : vector<1x256xf32> to vector<32x256xf32>
    %49 = arith.addf %47, %48 : vector<32x256xf32>
    %50 = arith.truncf %49 : vector<32x256xf32> to vector<32x256xbf16>
    %c0_17 = arith.constant 0 : index
    %c0_18 = arith.constant 0 : index
    %51 = vector.load %arg8[%c0_17, %c0_18] : memref<32x256xbf16, #tpu.memory_space<vmem>>, vector<32x256xbf16>
    tpu.vector_store %arg8[%c0_17, %c0_18], %50 {strides = array<i32>} : memref<32x256xbf16, #tpu.memory_space<vmem>>, vector<32x256xbf16>,
    return
  }
  func.func @transform_0(%arg0: i32, %arg1: memref<2xi32, #tpu.memory_space<smem>>) -> (i32, i32) {
    %c0_i32 = arith.constant 0 : i32
    %c0_i32_0 = arith.constant 0 : i32
    return %arg0, %c0_i32 : i32, i32
  }
  func.func @transform_1(%arg0: i32, %arg1: memref<2xi32, #tpu.memory_space<smem>>) -> (i32, i32, i32) {
    %c0_i32 = arith.constant 0 : i32
    %c0_i32_0 = arith.constant 0 : i32
    %c0_i32_1 = arith.constant 0 : i32
    %c0_i32_2 = arith.constant 0 : i32
    return %c0_i32, %c0_i32_0, %c0_i32_1 : i32, i32, i32
  }
  func.func @transform_2(%arg0: i32, %arg1: memref<2xi32, #tpu.memory_space<smem>>) -> (i32, i32, i32) {
    %c0_i32 = arith.constant 0 : i32
    %c0_i32_0 = arith.constant 0 : i32
    %c0_i32_1 = arith.constant 0 : i32
    %c0_i32_2 = arith.constant 0 : i32
    return %c0_i32, %c0_i32_0, %c0_i32_1 : i32, i32, i32
  }
  func.func @transform_3(%arg0: i32, %arg1: memref<2xi32, #tpu.memory_space<smem>>) -> (i32, i32, i32) {
    %c0_i32 = arith.constant 0 : i32
    %c0_i32_0 = arith.constant 0 : i32
    %c0_i32_1 = arith.constant 0 : i32
    %c0_i32_2 = arith.constant 0 : i32
    return %c0_i32, %c0_i32_0, %c0_i32_1 : i32, i32, i32
  }
  func.func @transform_4(%arg0: i32, %arg1: memref<2xi32, #tpu.memory_space<smem>>) -> (i32, i32, i32) {
    %c0_i32 = arith.constant 0 : i32
    %c0_i32_0 = arith.constant 0 : i32
    %c0_i32_1 = arith.constant 0 : i32
    %c0_i32_2 = arith.constant 0 : i32
    return %c0_i32, %c0_i32_0, %c0_i32_1 : i32, i32, i32
  }
  func.func @transform_5(%arg0: i32, %arg1: memref<2xi32, #tpu.memory_space<smem>>) -> (i32, i32) {
    %c0_i32 = arith.constant 0 : i32
    %c0_i32_0 = arith.constant 0 : i32
    %c0_i32_1 = arith.constant 0 : i32
    return %c0_i32, %c0_i32_0 : i32, i32
  }
  func.func @transform_6(%arg0: i32, %arg1: memref<2xi32, #tpu.memory_space<smem>>) -> (i32, i32) {
    %c0_i32 = arith.constant 0 : i32
    %c0_i32_0 = arith.constant 0 : i32
    return %arg0, %c0_i32 : i32, i32
  }
}

</mosaic_0001>

<llo_original>
// kernel: tpu_custom_call.1
$region0: #{tpu_custom_call.1}
  #allocation0 [shape = 'u32[]', space=smem, size = 0x4, offset = 0x4, fixed_abs, tag = 'smem constant byte address 0x4 - core index']
  #allocation1 [shape = 'u32[144,128]{1,0:T(1,128)}', space=vmem, size = 0x12000, scoped, tag = 'internal scratch']
  #allocation2 [shape = 's32[1]{0}', space=sflag, size = 0x4, scoped, tag = 'scoped memory for tpu_custom_call.1']
  #allocation3 [shape = 'u8[512]{0}', space=smem, size = 0x200, scoped, tag = 'prefetched SMEM operand 0']
  %s0 = inlined_call_operand.hbm [shape: s32[2], index: 0, kind: input, shape index: {}]
  %s1 = inlined_call_operand.hbm [shape: bf16[64,128], index: 1, kind: input, shape index: {}]
  %s2 = inlined_call_operand.hbm [shape: bf16[2,128,256], index: 2, kind: input, shape index: {}]
  %s3 = inlined_call_operand.hbm [shape: bf16[2,256,256], index: 3, kind: input, shape index: {}]
  %s4 = inlined_call_operand.hbm [shape: bf16[2,256,512], index: 4, kind: input, shape index: {}]
  %s5 = inlined_call_operand.hbm [shape: f32[2,8,512], index: 5, kind: input, shape index: {}]
  %s6 = inlined_call_operand.hbm [shape: bf16[256,256], index: 6, kind: input, shape index: {}]
  %s7 = inlined_call_operand.hbm [shape: bf16[64,256], index: 7, kind: output, shape index: {}]
  %s8 = sld [smem:[#allocation0]]
  $region81: #{tpu_custom_call.1} parent=0
    _
  %s10 = ssub.s32 1, %s8
  %s11 = scalar_select 0, %s10, %s8
  %13 = dma.hbm_to_smem %s0, 16, [#allocation3], [#allocation2]
  %14 = dma.done [#allocation2], 16
  %15 = sfence
  $region1: #{tpu_custom_call.1} parent=0
    #allocation4 [shape = 'u8[16384]{0}', space=vmem, size = 0x4000, scoped, tag = 'input window, operand 1']
    #allocation5 [shape = 's32[2]{0}', space=sflag, size = 0x8, scoped, tag = 'scoped memory for tpu_custom_call.1']
    #allocation6 [shape = 's32[2]{0}', space=sflag, size = 0x8, scoped, tag = 'scoped memory for tpu_custom_call.1']
    #allocation7 [shape = 'u8[131072]{0}', space=vmem, size = 0x20000, scoped, tag = 'input window, operand 2, single buffered']
    #allocation8 [shape = 's32[1]{0}', space=sflag, size = 0x4, scoped, tag = 'scoped memory for tpu_custom_call.1']
    #allocation9 [shape = 'u8[262144]{0}', space=vmem, size = 0x40000, scoped, tag = 'input window, operand 3, single buffered']
    #allocation10 [shape = 'u8[524288]{0}', space=vmem, size = 0x80000, scoped, tag = 'input window, operand 4, single buffered']
    #allocation11 [shape = 's32[1]{0}', space=sflag, size = 0x4, scoped, tag = 'scoped memory for tpu_custom_call.1']
    #allocation12 [shape = 'u8[32768]{0}', space=vmem, size = 0x8000, scoped, tag = 'input window, operand 5, single buffered']
    #allocation13 [shape = 'u8[131072]{0}', space=vmem, size = 0x20000, scoped, tag = 'input window, operand 6, single buffered']
    #allocation14 [shape = 's32[1]{0}', space=sflag, size = 0x4, scoped, tag = 'scoped memory for tpu_custom_call.1']
    #allocation15 [shape = 'u8[32768]{0}', space=vmem, size = 0x8000, scoped, tag = 'output window, operand 0']
    %16 = vsyncpa [#allocation5], 0
    %s17 = scalar_lea.sflag [#allocation5], 1
    %18 = vsyncpa %s17, 0
    %19 = vsyncpa [#allocation8], 0
    %20 = vsyncpa [#allocation11], 0
    %21 = vsyncpa [#allocation14], 0
    %22 = vsyncpa [#allocation6], 0
    %s23 = scalar_lea.sflag [#allocation6], 1
    %24 = vsyncpa %s23, 0
    loop: start=0, step=1, limit=4
    $region2: #{tpu_custom_call.1} parent=1 // loop_pre_header
      _
    $region3: #{tpu_custom_call.1} parent=1 // loop_header
      %s26 = sphi 0, %s30
      %p27 = scmp.ge.s32.totalorder %s26, 4
      %s36 = sphi 0, %s38
      %s39 = sphi 0, %s36
      %s40 = sphi 0, %s39
      %s56 = sphi 0, %s40
      %s60 = sphi 0, %s60
      %s62 = sphi 0, %s60
      %s63 = sphi 0, %s62
      %s77 = sphi 0, %s63
      %s81 = sphi 0, %s81
      %s83 = sphi 0, %s81
      %s84 = sphi 0, %s83
      %s98 = sphi 0, %s84
      %s102 = sphi 0, %s102
      %s104 = sphi 0, %s102
      %s105 = sphi 0, %s104
      %s119 = sphi 0, %s105
      %s123 = sphi 0, %s123
      %s125 = sphi 0, %s123
      %s126 = sphi 0, %s125
      %s140 = sphi 0, %s126
      %s144 = sphi 0, %s144
      %s146 = sphi 0, %s144
      %s147 = sphi 0, %s146
      %s161 = sphi 0, %s147
      %s167 = sphi 0, %s169
      %s170 = sphi 0, %s167
      %s171 = sphi 0, %s170
      %s187 = sphi 0, %s171
    $region4: #{tpu_custom_call.1} parent=1 // loop_header_branch
      %29 = sbr.rel (%p27) target = $region8
    $region5: #{tpu_custom_call.1} parent=1 // loop_body
      %s31 = ssub.s32 %s26, 1
      %s32 = ssub.s32 %s26, 2
      %s33 = sadd.s32 %s26, 1
      %s34 = ssub.s32 %s26, %s33
      %p35 = scmp.eq.s32.totalorder %s34, 0
      %s37 = sadd.s32 %s36, 1
      %s38 = scalar_select %p35, %s36, %s37
      %p41 = pneg %p35
      %p42 = scmp.eq.s32.totalorder %s26, 1
      %p43 = por %p41, %p42
      %p44 = scmp.ne.s32.totalorder %s36, %s39
      %p45 = scmp.eq.s32.totalorder %s26, 0
      %p46 = por %p44, %p45
      %p47 = scmp.ne.s32.totalorder %s36, %s39
      %p48 = scmp.eq.s32.totalorder %s31, 1
      %p49 = por %p47, %p48
      %p50 = scmp.ne.s32.totalorder %s39, %s40
      %p51 = scmp.eq.s32.totalorder %s31, 0
      %p52 = por %p50, %p51
      %p53 = scmp.ne.s32.totalorder %s39, %s40
      %p54 = scmp.eq.s32.totalorder %s32, 1
      %p55 = por %p53, %p54
      %p57 = scmp.ne.s32.totalorder %s40, %s56
      %p58 = scmp.eq.s32.totalorder %s32, 0
      %p59 = por %p57, %p58
      %s61 = sadd.s32 %s60, 1
      %p64 = scmp.eq.s32.totalorder %s26, 1
      %p65 = scmp.ne.s32.totalorder %s60, %s62
      %p66 = scmp.eq.s32.totalorder %s26, 0
      %p67 = por %p65, %p66
      %p68 = scmp.ne.s32.totalorder %s60, %s62
      %p69 = scmp.eq.s32.totalorder %s31, 1
      %p70 = por %p68, %p69
      %p71 = scmp.ne.s32.totalorder %s62, %s63
      %p72 = scmp.eq.s32.totalorder %s31, 0
      %p73 = por %p71, %p72
      %p74 = scmp.ne.s32.totalorder %s62, %s63
      %p75 = scmp.eq.s32.totalorder %s32, 1
      %p76 = por %p74, %p75
      %p78 = scmp.ne.s32.totalorder %s63, %s77
      %p79 = scmp.eq.s32.totalorder %s32, 0
      %p80 = por %p78, %p79
      %s82 = sadd.s32 %s81, 1
      %p85 = scmp.eq.s32.totalorder %s26, 1
      %p86 = scmp.ne.s32.totalorder %s81, %s83
      %p87 = scmp.eq.s32.totalorder %s26, 0
      %p88 = por %p86, %p87
      %p89 = scmp.ne.s32.totalorder %s81, %s83
      %p90 = scmp.eq.s32.totalorder %s31, 1
      %p91 = por %p89, %p90
      %p92 = scmp.ne.s32.totalorder %s83, %s84
      %p93 = scmp.eq.s32.totalorder %s31, 0
      %p94 = por %p92, %p93
      %p95 = scmp.ne.s32.totalorder %s83, %s84
      %p96 = scmp.eq.s32.totalorder %s32, 1
      %p97 = por %p95, %p96
      %p99 = scmp.ne.s32.totalorder %s84, %s98
      %p100 = scmp.eq.s32.totalorder %s32, 0
      %p101 = por %p99, %p100
      %s103 = sadd.s32 %s102, 1
      %p106 = scmp.eq.s32.totalorder %s26, 1
      %p107 = scmp.ne.s32.totalorder %s102, %s104
      %p108 = scmp.eq.s32.totalorder %s26, 0
      %p109 = por %p107, %p108
      %p110 = scmp.ne.s32.totalorder %s102, %s104
      %p111 = scmp.eq.s32.totalorder %s31, 1
      %p112 = por %p110, %p111
      %p113 = scmp.ne.s32.totalorder %s104, %s105
      %p114 = scmp.eq.s32.totalorder %s31, 0
      %p115 = por %p113, %p114
      %p116 = scmp.ne.s32.totalorder %s104, %s105
      %p117 = scmp.eq.s32.totalorder %s32, 1
      %p118 = por %p116, %p117
      %p120 = scmp.ne.s32.totalorder %s105, %s119
      %p121 = scmp.eq.s32.totalorder %s32, 0
      %p122 = por %p120, %p121
      %s124 = sadd.s32 %s123, 1
      %p127 = scmp.eq.s32.totalorder %s26, 1
      %p128 = scmp.ne.s32.totalorder %s123, %s125
      %p129 = scmp.eq.s32.totalorder %s26, 0
      %p130 = por %p128, %p129
      %p131 = scmp.ne.s32.totalorder %s123, %s125
      %p132 = scmp.eq.s32.totalorder %s31, 1
      %p133 = por %p131, %p132
      %p134 = scmp.ne.s32.totalorder %s125, %s126
      %p135 = scmp.eq.s32.totalorder %s31, 0
      %p136 = por %p134, %p135
      %p137 = scmp.ne.s32.totalorder %s125, %s126
      %p138 = scmp.eq.s32.totalorder %s32, 1
      %p139 = por %p137, %p138
      %p141 = scmp.ne.s32.totalorder %s126, %s140
      %p142 = scmp.eq.s32.totalorder %s32, 0
      %p143 = por %p141, %p142
      %s145 = sadd.s32 %s144, 1
      %p148 = scmp.eq.s32.totalorder %s26, 1
      %p149 = scmp.ne.s32.totalorder %s144, %s146
      %p150 = scmp.eq.s32.totalorder %s26, 0
      %p151 = por %p149, %p150
      %p152 = scmp.ne.s32.totalorder %s144, %s146
      %p153 = scmp.eq.s32.totalorder %s31, 1
      %p154 = por %p152, %p153
      %p155 = scmp.ne.s32.totalorder %s146, %s147
      %p156 = scmp.eq.s32.totalorder %s31, 0
      %p157 = por %p155, %p156
      %p158 = scmp.ne.s32.totalorder %s146, %s147
      %p159 = scmp.eq.s32.totalorder %s32, 1
      %p160 = por %p158, %p159
      %p162 = scmp.ne.s32.totalorder %s147, %s161
      %p163 = scmp.eq.s32.totalorder %s32, 0
      %p164 = por %p162, %p163
      %s165 = ssub.s32 %s26, %s33
      %p166 = scmp.eq.s32.totalorder %s165, 0
      %s168 = sadd.s32 %s167, 1
      %s169 = scalar_select %p166, %s167, %s168
      %p172 = pneg %p166
      %p173 = scmp.eq.s32.totalorder %s26, 1
      %p174 = por %p172, %p173
      %p175 = scmp.ne.s32.totalorder %s167, %s170
      %p176 = scmp.eq.s32.totalorder %s26, 0
      %p177 = por %p175, %p176
      %p178 = scmp.ne.s32.totalorder %s167, %s170
      %p179 = scmp.eq.s32.totalorder %s31, 1
      %p180 = por %p178, %p179
      %p181 = scmp.ne.s32.totalorder %s170, %s171
      %p182 = scmp.eq.s32.totalorder %s31, 0
      %p183 = por %p181, %p182
      %p184 = scmp.ne.s32.totalorder %s170, %s171
      %p185 = scmp.eq.s32.totalorder %s32, 1
      %p186 = por %p184, %p185
      %p188 = scmp.ne.s32.totalorder %s171, %s187
      %p189 = scmp.eq.s32.totalorder %s32, 0
      %p190 = por %p188, %p189
      %p191 = scmp.le.s32.totalorder 1, %s26
      %p192 = scmp.lt.s32.totalorder %s26, 3
      %p193 = pnand %p191, %p192
      %p194 = pneg %p193
      // Predicated region
      $region9: #{tpu_custom_call.1} parent=5 // pred_check
        _
      $region10: #{tpu_custom_call.1} parent=5 // pred_check_branch
        %196 = sbr.rel (%p193) target = $region12
      $region11: #{tpu_custom_call.1} parent=5 // pred_region
        %s197 = ssub.s32 %s26, 1
        // Predicated region
        $region13: #{tpu_custom_call.1} parent=11 // pred_check
          %p198 = pneg %p73
        $region14: #{tpu_custom_call.1} parent=11 // pred_check_branch
          %200 = sbr.rel (%p198) target = $region16
        $region15: #{tpu_custom_call.1} parent=11 // pred_region
          %s202 = ssub.s32 4096, 4096
          %203 = vsyncadd [#allocation8], %s202
          %s204 = sshll.u32 [#allocation7], 4
          %s205 = int_to_ptr.vmem [resolvable:$true] %s204
          %210 = dma.hbm_to_vmem [thread:$0]  %s2, 4096, %s205, [#allocation8], 128, 128, 8
        $region16: #{tpu_custom_call.1} parent=11 // pred_fallthru
          _
        // Predicated region
        $region17: #{tpu_custom_call.1} parent=11 // pred_check
          %p211 = pneg %p94
        $region18: #{tpu_custom_call.1} parent=11 // pred_check_branch
          %213 = sbr.rel (%p211) target = $region20
        $region19: #{tpu_custom_call.1} parent=11 // pred_region
          %s215 = ssub.s32 8192, 8192
          %216 = vsyncadd [#allocation8], %s215
          %s217 = sshll.u32 [#allocation9], 4
          %s218 = int_to_ptr.vmem [resolvable:$true] %s217
          %223 = dma.hbm_to_vmem [thread:$0]  %s3, 8192, %s218, [#allocation8], 128, 128, 8
        $region20: #{tpu_custom_call.1} parent=11 // pred_fallthru
          _
        // Predicated region
        $region21: #{tpu_custom_call.1} parent=11 // pred_check
          %p224 = pneg %p115
        $region22: #{tpu_custom_call.1} parent=11 // pred_check_branch
          %226 = sbr.rel (%p224) target = $region24
        $region23: #{tpu_custom_call.1} parent=11 // pred_region
          %s228 = ssub.s32 16384, 16384
          %229 = vsyncadd [#allocation11], %s228
          %s230 = sshll.u32 [#allocation10], 4
          %s231 = int_to_ptr.vmem [resolvable:$true] %s230
          %236 = dma.hbm_to_vmem [thread:$0]  %s4, 16384, %s231, [#allocation11], 256, 256, 16
        $region24: #{tpu_custom_call.1} parent=11 // pred_fallthru
          _
        // Predicated region
        $region25: #{tpu_custom_call.1} parent=11 // pred_check
          %p237 = pneg %p136
        $region26: #{tpu_custom_call.1} parent=11 // pred_check_branch
          %239 = sbr.rel (%p237) target = $region28
        $region27: #{tpu_custom_call.1} parent=11 // pred_region
          %s241 = ssub.s32 1024, 1024
          %242 = vsyncadd [#allocation11], %s241
          %s243 = sshll.u32 [#allocation12], 4
          %s244 = int_to_ptr.vmem [resolvable:$true] %s243
          %249 = dma.hbm_to_vmem [thread:$0]  %s5, 1024, %s244, [#allocation11], 512, 512, 32
        $region28: #{tpu_custom_call.1} parent=11 // pred_fallthru
          _
        // Predicated region
        $region29: #{tpu_custom_call.1} parent=11 // pred_check
          %p250 = pneg %p157
        $region30: #{tpu_custom_call.1} parent=11 // pred_check_branch
          %252 = sbr.rel (%p250) target = $region32
        $region31: #{tpu_custom_call.1} parent=11 // pred_region
          %s254 = ssub.s32 4096, 4096
          %255 = vsyncadd [#allocation14], %s254
          %s256 = sshll.u32 [#allocation13], 4
          %s257 = int_to_ptr.vmem [resolvable:$true] %s256
          %262 = dma.hbm_to_vmem [thread:$0]  %s6, 4096, %s257, [#allocation14], 128, 128, 8
        $region32: #{tpu_custom_call.1} parent=11 // pred_fallthru
          _
      $region12: #{tpu_custom_call.1} parent=5 // pred_fallthru
        _
      %p263 = scmp.lt.s32.totalorder %s26, 2
      // Predicated region
      $region33: #{tpu_custom_call.1} parent=5 // pred_check
        %p264 = pneg %p263
      $region34: #{tpu_custom_call.1} parent=5 // pred_check_branch
        %266 = sbr.rel (%p264) target = $region36
      $region35: #{tpu_custom_call.1} parent=5 // pred_region
        // Predicated region
        $region37: #{tpu_custom_call.1} parent=35 // pred_check
          %p267 = pneg %p46
        $region38: #{tpu_custom_call.1} parent=35 // pred_check_branch
          %269 = sbr.rel (%p267) target = $region40
        $region39: #{tpu_custom_call.1} parent=35 // pred_region
          %s270 = sand.u32 %s36, 1
          %s271 = scalar_lea.sflag [#allocation5], %s270
          %s272 = sand.u32 %s36, 1
          %s273 = smul.addr %s272, 16
          %s274 = scalar_lea.vmem [#allocation4], %s273
          %s275 = smul.u32 4, %s26
          %s277 = ssub.s32 256, 256
          %278 = vsyncadd %s271, %s277
          %s279 = smul.addr %s275, 64
          %s280 = scalar_lea.hbm %s1, %s279
          %s281 = sshll.u32 %s274, 4
          %s282 = int_to_ptr.vmem [resolvable:$true] %s281
          %287 = dma.hbm_to_vmem [thread:$0]  %s280, 256, %s282, %s271, 64, 64, 4
        $region40: #{tpu_custom_call.1} parent=35 // pred_fallthru
          _
      $region36: #{tpu_custom_call.1} parent=5 // pred_fallthru
        _
      %p288 = scmp.le.s32.totalorder 1, %s26
      %p289 = scmp.lt.s32.totalorder %s26, 3
      %p290 = pnand %p288, %p289
      %p291 = pneg %p290
      // Predicated region
      $region41: #{tpu_custom_call.1} parent=5 // pred_check
        _
      $region42: #{tpu_custom_call.1} parent=5 // pred_check_branch
        %293 = sbr.rel (%p290) target = $region44
      $region43: #{tpu_custom_call.1} parent=5 // pred_region
        %s294 = ssub.s32 %s26, 1
        %s295 = sand.u32 %s39, 1
        %s296 = scalar_lea.sflag [#allocation5], %s295
        %s297 = sand.u32 %s39, 1
        %s298 = smul.addr %s297, 16
        %s299 = scalar_lea.vmem [#allocation4], %s298
        // Predicated region
        $region45: #{tpu_custom_call.1} parent=43 // pred_check
          %p300 = pneg %p52
        $region46: #{tpu_custom_call.1} parent=43 // pred_check_branch
          %302 = sbr.rel (%p300) target = $region48
        $region47: #{tpu_custom_call.1} parent=43 // pred_region
          %303 = dma.done %s296, 256
        $region48: #{tpu_custom_call.1} parent=43 // pred_fallthru
          _
        // Predicated region
        $region49: #{tpu_custom_call.1} parent=43 // pred_check
          %p304 = pneg %p73
        $region50: #{tpu_custom_call.1} parent=43 // pred_check_branch
          %306 = sbr.rel (%p304) target = $region52
        $region51: #{tpu_custom_call.1} parent=43 // pred_region
          %307 = dma.done [#allocation8], 4096
        $region52: #{tpu_custom_call.1} parent=43 // pred_fallthru
          _
        // Predicated region
        $region53: #{tpu_custom_call.1} parent=43 // pred_check
          %p308 = pneg %p94
        $region54: #{tpu_custom_call.1} parent=43 // pred_check_branch
          %310 = sbr.rel (%p308) target = $region56
        $region55: #{tpu_custom_call.1} parent=43 // pred_region
          %311 = dma.done [#allocation8], 8192
        $region56: #{tpu_custom_call.1} parent=43 // pred_fallthru
          _
        // Predicated region
        $region57: #{tpu_custom_call.1} parent=43 // pred_check
          %p312 = pneg %p115
        $region58: #{tpu_custom_call.1} parent=43 // pred_check_branch
          %314 = sbr.rel (%p312) target = $region60
        $region59: #{tpu_custom_call.1} parent=43 // pred_region
          %315 = dma.done [#allocation11], 16384
        $region60: #{tpu_custom_call.1} parent=43 // pred_fallthru
          _
        // Predicated region
        $region61: #{tpu_custom_call.1} parent=43 // pred_check
          %p316 = pneg %p136
        $region62: #{tpu_custom_call.1} parent=43 // pred_check_branch
          %318 = sbr.rel (%p316) target = $region64
        $region63: #{tpu_custom_call.1} parent=43 // pred_region
          %319 = dma.done [#allocation11], 1024
        $region64: #{tpu_custom_call.1} parent=43 // pred_fallthru
          _
        // Predicated region
        $region65: #{tpu_custom_call.1} parent=43 // pred_check
          %p320 = pneg %p157
        $region66: #{tpu_custom_call.1} parent=43 // pred_check_branch
          %322 = sbr.rel (%p320) target = $region68
        $region67: #{tpu_custom_call.1} parent=43 // pred_region
          %323 = dma.done [#allocation14], 4096
        $region68: #{tpu_custom_call.1} parent=43 // pred_fallthru
          _
        %s324 = sand.u32 %s39, 1
        %s325 = scalar_lea.sflag [#allocation5], %s324
        %s326 = sand.u32 %s39, 1
        %s327 = smul.addr %s326, 16
        %s328 = scalar_lea.vmem [#allocation4], %s327
        %p329 = pneg %p52
        %p330 = pneg %p49
        %p331 = pneg %p73
        %p332 = pneg %p70
        %p333 = pneg %p94
        %p334 = pneg %p91
        %p335 = pneg %p115
        %p336 = pneg %p112
        %p337 = pneg %p136
        %p338 = pneg %p133
        %p339 = pneg %p157
        %p340 = pneg %p154
        %p341 = pneg %p183
        %p342 = pneg %p180
        %s343 = sand.u32 %s170, 1
        %s344 = scalar_lea.sflag [#allocation6], %s343
        %s345 = sand.u32 %s170, 1
        %s346 = smul.addr %s345, 32
        %s347 = scalar_lea.vmem [#allocation15], %s346
        %s348 = smul.u32 4, %s31
        %s349 = smul.u32 4, %s31
        %s351 = sld [smem:[#allocation3 + %s31]]
        %s352 = smul.u32 %s351, 4
        %s353 = smul.addr %s352, 8
        %s354 = scalar_lea.vmem [#allocation12], %s353
        %v355 = vld [vmem:[%s354] sm:$0xff]
        %v356 = vld [vmem:[%s354 + $0x8] sm:$0xff]
        %v357 = vld [vmem:[%s354 + $0x10] sm:$0xff]
        %v358 = vld [vmem:[%s354 + $0x18] sm:$0xff]
        %v359 = vld [vmem:[%s299] sm:$0xf]
        %v360 = vld [vmem:[%s299 + $0x4] sm:$0xf]
        %v361 = vld [vmem:[%s299 + $0x8] sm:$0xf]
        %v362 = vld [vmem:[%s299 + $0xc] sm:$0xf]
        %s363 = smul.u32 %s351, 32
        %s364 = smul.addr %s363, 4
        %s365 = scalar_lea.vmem [#allocation7], %s364
        %v366 = vld [vmem:[%s365] sm:$0xff]
        %v367 = vld [vmem:[%s365 + $0x8] sm:$0xff]
        %v368 = vld [vmem:[%s365 + $0x10] sm:$0xff]
        %v369 = vld [vmem:[%s365 + $0x18] sm:$0xff]
        %v370 = vld [vmem:[%s365 + $0x20] sm:$0xff]
        %v371 = vld [vmem:[%s365 + $0x28] sm:$0xff]
        %v372 = vld [vmem:[%s365 + $0x30] sm:$0xff]
        %v373 = vld [vmem:[%s365 + $0x38] sm:$0xff]
        %v374 = vld [vmem:[%s365 + $0x40] sm:$0xff]
        %v375 = vld [vmem:[%s365 + $0x48] sm:$0xff]
        %v376 = vld [vmem:[%s365 + $0x50] sm:$0xff]
        %v377 = vld [vmem:[%s365 + $0x58] sm:$0xff]
        %v378 = vld [vmem:[%s365 + $0x60] sm:$0xff]
        %v379 = vld [vmem:[%s365 + $0x68] sm:$0xff]
        %v380 = vld [vmem:[%s365 + $0x70] sm:$0xff]
        %v381 = vld [vmem:[%s365 + $0x78] sm:$0xff]
        %v382 = vlaneseq
        %v383 = vshrl.u32 %v382, 7
        %v384 = vsub.s32 0, %v383
        %v385 = vrot.slane %v355, %v384
        %v386 = vlaneseq
        %v387 = vshrl.u32 %v386, 7
        %v388 = vsub.s32 0, %v387
        %v389 = vrot.slane %v356, %v388
        %v394 = vunpack.c.l.b16 %v359
        %v395 = vunpack.c.l.b16 %v360
        %v396 = vunpack.c.l.b16 %v361
        %v397 = vunpack.c.l.b16 %v362
        %v398 = vpack.c.b16 %v395, %v394
        %v399 = vpack.c.b16 %v397, %v396
        %v418 = vunpack.c.l.b16 %v366
        %v419 = vunpack.c.h.b16 %v366
        %v420 = vunpack.c.l.b16 %v367
        %v421 = vunpack.c.h.b16 %v367
        %v422 = vunpack.c.l.b16 %v368
        %v423 = vunpack.c.h.b16 %v368
        %v424 = vunpack.c.l.b16 %v369
        %v425 = vunpack.c.h.b16 %v369
        %v426 = vunpack.c.l.b16 %v370
        %v427 = vunpack.c.h.b16 %v370
        %v428 = vunpack.c.l.b16 %v371
        %v429 = vunpack.c.h.b16 %v371
        %v430 = vunpack.c.l.b16 %v372
        %v431 = vunpack.c.h.b16 %v372
        %v432 = vunpack.c.l.b16 %v373
        %v433 = vunpack.c.h.b16 %v373
        %v434 = vunpack.c.l.b16 %v374
        %v435 = vunpack.c.h.b16 %v374
        %v436 = vunpack.c.l.b16 %v375
        %v437 = vunpack.c.h.b16 %v375
        %v438 = vunpack.c.l.b16 %v376
        %v439 = vunpack.c.h.b16 %v376
        %v440 = vunpack.c.l.b16 %v377
        %v441 = vunpack.c.h.b16 %v377
        %v442 = vunpack.c.l.b16 %v378
        %v443 = vunpack.c.h.b16 %v378
        %v444 = vunpack.c.l.b16 %v379
        %v445 = vunpack.c.h.b16 %v379
        %v446 = vunpack.c.l.b16 %v380
        %v447 = vunpack.c.h.b16 %v380
        %v448 = vunpack.c.l.b16 %v381
        %v449 = vunpack.c.h.b16 %v381
        %v450 = vpack.c.b16 %v420, %v418
        %v451 = vpack.c.b16 %v421, %v419
        %v452 = vpack.c.b16 %v424, %v422
        %v453 = vpack.c.b16 %v425, %v423
        %v454 = vpack.c.b16 %v428, %v426
        %v455 = vpack.c.b16 %v429, %v427
        %v456 = vpack.c.b16 %v432, %v430
        %v457 = vpack.c.b16 %v433, %v431
        %v458 = vpack.c.b16 %v436, %v434
        %v459 = vpack.c.b16 %v437, %v435
        %v460 = vpack.c.b16 %v440, %v438
        %v461 = vpack.c.b16 %v441, %v439
        %v462 = vpack.c.b16 %v444, %v442
        %v463 = vpack.c.b16 %v445, %v443
        %v464 = vpack.c.b16 %v448, %v446
        %v465 = vpack.c.b16 %v449, %v447
        %482 = vmatprep.subr.bf16.mxu0 %v451
        %483 = vmatpush1.bf16.msra.mxu0 %v450
        %484 = vmatprep.subr.bf16.mxu0 %v453
        %485 = vmatpush1.bf16.msra.mxu0 %v452
        %486 = vmatprep.subr.bf16.mxu0 %v455
        %487 = vmatpush1.bf16.msra.mxu0 %v454
        %488 = vmatprep.subr.bf16.mxu0 %v457
        %489 = vmatpush1.bf16.msra.mxu0 %v456
        %490 = vmatprep.subr.bf16.mxu0 %v459
        %491 = vmatpush1.bf16.msra.mxu0 %v458
        %492 = vmatprep.subr.bf16.mxu0 %v461
        %493 = vmatpush1.bf16.msra.mxu0 %v460
        %494 = vmatprep.subr.bf16.mxu0 %v463
        %495 = vmatpush1.bf16.msra.mxu0 %v462
        %496 = vmatprep.subr.bf16.mxu0 %v465
        %497 = vmatpush1.bf16.msra.mxu0 %v464
        %498 = vmatprep.subr.bf16.mxu0 0
        %499 = vmatpush1.bf16.msra.mxu0 0
        %500 = vmatprep.subr.bf16.mxu0 0
        %501 = vmatpush1.bf16.msra.mxu0 0
        %502 = vmatprep.subr.bf16.mxu0 0
        %503 = vmatpush1.bf16.msra.mxu0 0
        %504 = vmatprep.subr.bf16.mxu0 0
        %505 = vmatpush1.bf16.msra.mxu0 0
        %506 = vmatprep.subr.bf16.mxu0 0
        %507 = vmatpush1.bf16.msra.mxu0 0
        %508 = vmatprep.subr.bf16.mxu0 0
        %509 = vmatpush1.bf16.msra.mxu0 0
        %510 = vmatprep.subr.bf16.mxu0 0
        %511 = vmatpush1.bf16.msra.mxu0 0
        %512 = vmatprep.subr.bf16.mxu0 0
        %513 = vmatpush1.bf16.msra.mxu0 0
        %514 = vmatprep.mubr.bf16.mxu0 0
        %515 = vmatmul.mubr.bf16.gmra.mrb[0].mxu0 %v398
        %v516 = vpop.f32.mrb[0].mxu0
        %v517 = vadd.f32 %v385, %v516
        %v518 = vpop.f32.mrb[0].mxu0
        %v519 = vadd.f32 %v389, %v518
        %v520 = vpop.f32.mrb[0].mxu0
        %v521 = vadd.f32 %v385, %v520
        %v522 = vpop.f32.mrb[0].mxu0
        %v523 = vadd.f32 %v389, %v522
        %524 = vmatprep.mubr.bf16.mxu0 0
        %525 = vmatmul.mubr.bf16.gmra.mrb[0].mxu0 %v399
        %v526 = vpop.f32.mrb[0].mxu0
        %v527 = vadd.f32 %v385, %v526
        %v528 = vpop.f32.mrb[0].mxu0
        %v529 = vadd.f32 %v389, %v528
        %v530 = vpop.f32.mrb[0].mxu0
        %v531 = vadd.f32 %v385, %v530
        %v532 = vpop.f32.mrb[0].mxu0
        %v533 = vadd.f32 %v389, %v532
        %534 = vdwg.mxu0
        %v535 = vmax.f32 %v517, 0.0
        %v536 = vmax.f32 %v519, 0.0
        %v537 = vmax.f32 %v521, 0.0
        %v538 = vmax.f32 %v523, 0.0
        %v539 = vmax.f32 %v527, 0.0
        %v540 = vmax.f32 %v529, 0.0
        %v541 = vmax.f32 %v531, 0.0
        %v542 = vmax.f32 %v533, 0.0
        %s543 = smul.u32 %s351, 64
        %s544 = smul.addr %s543, 4
        %s545 = scalar_lea.vmem [#allocation9], %s544
        %v546 = vld [vmem:[%s545] sm:$0xff]
        %v547 = vld [vmem:[%s545 + $0x8] sm:$0xff]
        %v548 = vld [vmem:[%s545 + $0x10] sm:$0xff]
        %v549 = vld [vmem:[%s545 + $0x18] sm:$0xff]
        %v550 = vld [vmem:[%s545 + $0x20] sm:$0xff]
        %v551 = vld [vmem:[%s545 + $0x28] sm:$0xff]
        %v552 = vld [vmem:[%s545 + $0x30] sm:$0xff]
        %v553 = vld [vmem:[%s545 + $0x38] sm:$0xff]
        %v554 = vld [vmem:[%s545 + $0x40] sm:$0xff]
        %v555 = vld [vmem:[%s545 + $0x48] sm:$0xff]
        %v556 = vld [vmem:[%s545 + $0x50] sm:$0xff]
        %v557 = vld [vmem:[%s545 + $0x58] sm:$0xff]
        %v558 = vld [vmem:[%s545 + $0x60] sm:$0xff]
        %v559 = vld [vmem:[%s545 + $0x68] sm:$0xff]
        %v560 = vld [vmem:[%s545 + $0x70] sm:$0xff]
        %v561 = vld [vmem:[%s545 + $0x78] sm:$0xff]
        %v562 = vld [vmem:[%s545 + $0x80] sm:$0xff]
        %v563 = vld [vmem:[%s545 + $0x88] sm:$0xff]
        %v564 = vld [vmem:[%s545 + $0x90] sm:$0xff]
        %v565 = vld [vmem:[%s545 + $0x98] sm:$0xff]
        %v566 = vld [vmem:[%s545 + $0xa0] sm:$0xff]
        %v567 = vld [vmem:[%s545 + $0xa8] sm:$0xff]
        %v568 = vld [vmem:[%s545 + $0xb0] sm:$0xff]
        %v569 = vld [vmem:[%s545 + $0xb8] sm:$0xff]
        %v570 = vld [vmem:[%s545 + $0xc0] sm:$0xff]
        %v571 = vld [vmem:[%s545 + $0xc8] sm:$0xff]
        %v572 = vld [vmem:[%s545 + $0xd0] sm:$0xff]
        %v573 = vld [vmem:[%s545 + $0xd8] sm:$0xff]
        %v574 = vld [vmem:[%s545 + $0xe0] sm:$0xff]
        %v575 = vld [vmem:[%s545 + $0xe8] sm:$0xff]
        %v576 = vld [vmem:[%s545 + $0xf0] sm:$0xff]
        %v577 = vld [vmem:[%s545 + $0xf8] sm:$0xff]
        %v578 = vpack.c.bf16 %v537, %v535
        %v579 = vpack.c.bf16 %v538, %v536
        %v580 = vpack.c.bf16 %v541, %v539
        %v581 = vpack.c.bf16 %v542, %v540
        %v582 = vlaneseq
        %v583 = vshrl.u32 %v582, 7
        %v584 = vsub.s32 1, %v583
        %v585 = vrot.slane %v355, %v584
        %v586 = vlaneseq
        %v587 = vshrl.u32 %v586, 7
        %v588 = vsub.s32 1, %v587
        %v589 = vrot.slane %v356, %v588
        %v622 = vunpack.c.l.b16 %v546
        %v623 = vunpack.c.h.b16 %v546
        %v624 = vunpack.c.l.b16 %v547
        %v625 = vunpack.c.h.b16 %v547
        %v626 = vunpack.c.l.b16 %v548
        %v627 = vunpack.c.h.b16 %v548
        %v628 = vunpack.c.l.b16 %v549
        %v629 = vunpack.c.h.b16 %v549
        %v630 = vunpack.c.l.b16 %v550
        %v631 = vunpack.c.h.b16 %v550
        %v632 = vunpack.c.l.b16 %v551
        %v633 = vunpack.c.h.b16 %v551
        %v634 = vunpack.c.l.b16 %v552
        %v635 = vunpack.c.h.b16 %v552
        %v636 = vunpack.c.l.b16 %v553
        %v637 = vunpack.c.h.b16 %v553
        %v638 = vunpack.c.l.b16 %v554
        %v639 = vunpack.c.h.b16 %v554
        %v640 = vunpack.c.l.b16 %v555
        %v641 = vunpack.c.h.b16 %v555
        %v642 = vunpack.c.l.b16 %v556
        %v643 = vunpack.c.h.b16 %v556
        %v644 = vunpack.c.l.b16 %v557
        %v645 = vunpack.c.h.b16 %v557
        %v646 = vunpack.c.l.b16 %v558
        %v647 = vunpack.c.h.b16 %v558
        %v648 = vunpack.c.l.b16 %v559
        %v649 = vunpack.c.h.b16 %v559
        %v650 = vunpack.c.l.b16 %v560
        %v651 = vunpack.c.h.b16 %v560
        %v652 = vunpack.c.l.b16 %v561
        %v653 = vunpack.c.h.b16 %v561
        %v654 = vunpack.c.l.b16 %v562
        %v655 = vunpack.c.h.b16 %v562
        %v656 = vunpack.c.l.b16 %v563
        %v657 = vunpack.c.h.b16 %v563
        %v658 = vunpack.c.l.b16 %v564
        %v659 = vunpack.c.h.b16 %v564
        %v660 = vunpack.c.l.b16 %v565
        %v661 = vunpack.c.h.b16 %v565
        %v662 = vunpack.c.l.b16 %v566
        %v663 = vunpack.c.h.b16 %v566
        %v664 = vunpack.c.l.b16 %v567
        %v665 = vunpack.c.h.b16 %v567
        %v666 = vunpack.c.l.b16 %v568
        %v667 = vunpack.c.h.b16 %v568
        %v668 = vunpack.c.l.b16 %v569
        %v669 = vunpack.c.h.b16 %v569
        %v670 = vunpack.c.l.b16 %v570
        %v671 = vunpack.c.h.b16 %v570
        %v672 = vunpack.c.l.b16 %v571
        %v673 = vunpack.c.h.b16 %v571
        %v674 = vunpack.c.l.b16 %v572
        %v675 = vunpack.c.h.b16 %v572
        %v676 = vunpack.c.l.b16 %v573
        %v677 = vunpack.c.h.b16 %v573
        %v678 = vunpack.c.l.b16 %v574
        %v679 = vunpack.c.h.b16 %v574
        %v680 = vunpack.c.l.b16 %v575
        %v681 = vunpack.c.h.b16 %v575
        %v682 = vunpack.c.l.b16 %v576
        %v683 = vunpack.c.h.b16 %v576
        %v684 = vunpack.c.l.b16 %v577
        %v685 = vunpack.c.h.b16 %v577
        %v686 = vpack.c.b16 %v624, %v622
        %v687 = vpack.c.b16 %v625, %v623
        %v688 = vpack.c.b16 %v628, %v626
        %v689 = vpack.c.b16 %v629, %v627
        %v690 = vpack.c.b16 %v632, %v630
        %v691 = vpack.c.b16 %v633, %v631
        %v692 = vpack.c.b16 %v636, %v634
        %v693 = vpack.c.b16 %v637, %v635
        %v694 = vpack.c.b16 %v640, %v638
        %v695 = vpack.c.b16 %v641, %v639
        %v696 = vpack.c.b16 %v644, %v642
        %v697 = vpack.c.b16 %v645, %v643
        %v698 = vpack.c.b16 %v648, %v646
        %v699 = vpack.c.b16 %v649, %v647
        %v700 = vpack.c.b16 %v652, %v650
        %v701 = vpack.c.b16 %v653, %v651
        %v702 = vpack.c.b16 %v656, %v654
        %v703 = vpack.c.b16 %v657, %v655
        %v704 = vpack.c.b16 %v660, %v658
        %v705 = vpack.c.b16 %v661, %v659
        %v706 = vpack.c.b16 %v664, %v662
        %v707 = vpack.c.b16 %v665, %v663
        %v708 = vpack.c.b16 %v668, %v666
        %v709 = vpack.c.b16 %v669, %v667
        %v710 = vpack.c.b16 %v672, %v670
        %v711 = vpack.c.b16 %v673, %v671
        %v712 = vpack.c.b16 %v676, %v674
        %v713 = vpack.c.b16 %v677, %v675
        %v714 = vpack.c.b16 %v680, %v678
        %v715 = vpack.c.b16 %v681, %v679
        %v716 = vpack.c.b16 %v684, %v682
        %v717 = vpack.c.b16 %v685, %v683
        %750 = vmatprep.subr.bf16.mxu0 %v687
        %751 = vmatpush1.bf16.msra.mxu0 %v686
        %752 = vmatprep.subr.bf16.mxu0 %v689
        %753 = vmatpush1.bf16.msra.mxu0 %v688
        %754 = vmatprep.subr.bf16.mxu0 %v691
        %755 = vmatpush1.bf16.msra.mxu0 %v690
        %756 = vmatprep.subr.bf16.mxu0 %v693
        %757 = vmatpush1.bf16.msra.mxu0 %v692
        %758 = vmatprep.subr.bf16.mxu0 %v695
        %759 = vmatpush1.bf16.msra.mxu0 %v694
        %760 = vmatprep.subr.bf16.mxu0 %v697
        %761 = vmatpush1.bf16.msra.mxu0 %v696
        %762 = vmatprep.subr.bf16.mxu0 %v699
        %763 = vmatpush1.bf16.msra.mxu0 %v698
        %764 = vmatprep.subr.bf16.mxu0 %v701
        %765 = vmatpush1.bf16.msra.mxu0 %v700
        %766 = vmatprep.subr.bf16.mxu0 %v703
        %767 = vmatpush1.bf16.msra.mxu0 %v702
        %768 = vmatprep.subr.bf16.mxu0 %v705
        %769 = vmatpush1.bf16.msra.mxu0 %v704
        %770 = vmatprep.subr.bf16.mxu0 %v707
        %771 = vmatpush1.bf16.msra.mxu0 %v706
        %772 = vmatprep.subr.bf16.mxu0 %v709
        %773 = vmatpush1.bf16.msra.mxu0 %v708
        %774 = vmatprep.subr.bf16.mxu0 %v711
        %775 = vmatpush1.bf16.msra.mxu0 %v710
        %776 = vmatprep.subr.bf16.mxu0 %v713
        %777 = vmatpush1.bf16.msra.mxu0 %v712
        %778 = vmatprep.subr.bf16.mxu0 %v715
        %779 = vmatpush1.bf16.msra.mxu0 %v714
        %780 = vmatprep.subr.bf16.mxu0 %v717
        %781 = vmatpush1.bf16.msra.mxu0 %v716
        %782 = vmatprep.mubr.bf16.mxu0 %v579
        %783 = vmatmul.mubr.bf16.gmra.mrb[0].mxu0 %v578
        %v784 = vpop.f32.mrb[0].mxu0
        %v785 = vadd.f32 %v585, %v784
        %v786 = vpop.f32.mrb[0].mxu0
        %v787 = vadd.f32 %v589, %v786
        %v788 = vpop.f32.mrb[0].mxu0
        %v789 = vadd.f32 %v585, %v788
        %v790 = vpop.f32.mrb[0].mxu0
        %v791 = vadd.f32 %v589, %v790
        %792 = vmatprep.mubr.bf16.mxu0 %v581
        %793 = vmatmul.mubr.bf16.gmra.mrb[0].mxu0 %v580
        %v794 = vpop.f32.mrb[0].mxu0
        %v795 = vadd.f32 %v585, %v794
        %v796 = vpop.f32.mrb[0].mxu0
        %v797 = vadd.f32 %v589, %v796
        %v798 = vpop.f32.mrb[0].mxu0
        %v799 = vadd.f32 %v585, %v798
        %v800 = vpop.f32.mrb[0].mxu0
        %v801 = vadd.f32 %v589, %v800
        %802 = vdwg.mxu0
        %v803 = vmax.f32 %v785, 0.0
        %v804 = vmax.f32 %v787, 0.0
        %v805 = vmax.f32 %v789, 0.0
        %v806 = vmax.f32 %v791, 0.0
        %v807 = vmax.f32 %v795, 0.0
        %v808 = vmax.f32 %v797, 0.0
        %v809 = vmax.f32 %v799, 0.0
        %v810 = vmax.f32 %v801, 0.0
        %s811 = smul.u32 %s351, 128
        %s812 = smul.addr %s811, 4
        %s813 = scalar_lea.vmem [#allocation10], %s812
        %v814 = vld [vmem:[%s813] sm:$0xff]
        %v815 = vld [vmem:[%s813 + $0x8] sm:$0xff]
        %v816 = vld [vmem:[%s813 + $0x10] sm:$0xff]
        %v817 = vld [vmem:[%s813 + $0x18] sm:$0xff]
        %v818 = vld [vmem:[%s813 + $0x20] sm:$0xff]
        %v819 = vld [vmem:[%s813 + $0x28] sm:$0xff]
        %v820 = vld [vmem:[%s813 + $0x30] sm:$0xff]
        %v821 = vld [vmem:[%s813 + $0x38] sm:$0xff]
        %v822 = vld [vmem:[%s813 + $0x40] sm:$0xff]
        %v823 = vld [vmem:[%s813 + $0x48] sm:$0xff]
        %v824 = vld [vmem:[%s813 + $0x50] sm:$0xff]
        %v825 = vld [vmem:[%s813 + $0x58] sm:$0xff]
        %v826 = vld [vmem:[%s813 + $0x60] sm:$0xff]
        %v827 = vld [vmem:[%s813 + $0x68] sm:$0xff]
        %v828 = vld [vmem:[%s813 + $0x70] sm:$0xff]
        %v829 = vld [vmem:[%s813 + $0x78] sm:$0xff]
        %v830 = vld [vmem:[%s813 + $0x80] sm:$0xff]
        %v831 = vld [vmem:[%s813 + $0x88] sm:$0xff]
        %v832 = vld [vmem:[%s813 + $0x90] sm:$0xff]
        %v833 = vld [vmem:[%s813 + $0x98] sm:$0xff]
        %v834 = vld [vmem:[%s813 + $0xa0] sm:$0xff]
        %v835 = vld [vmem:[%s813 + $0xa8] sm:$0xff]
        %v836 = vld [vmem:[%s813 + $0xb0] sm:$0xff]
        %v837 = vld [vmem:[%s813 + $0xb8] sm:$0xff]
        %v838 = vld [vmem:[%s813 + $0xc0] sm:$0xff]
        %v839 = vld [vmem:[%s813 + $0xc8] sm:$0xff]
        %v840 = vld [vmem:[%s813 + $0xd0] sm:$0xff]
        %v841 = vld [vmem:[%s813 + $0xd8] sm:$0xff]
        %v842 = vld [vmem:[%s813 + $0xe0] sm:$0xff]
        %v843 = vld [vmem:[%s813 + $0xe8] sm:$0xff]
        %v844 = vld [vmem:[%s813 + $0xf0] sm:$0xff]
        %v845 = vld [vmem:[%s813 + $0xf8] sm:$0xff]
        %v846 = vld [vmem:[%s813 + $0x100] sm:$0xff]
        %v847 = vld [vmem:[%s813 + $0x108] sm:$0xff]
        %v848 = vld [vmem:[%s813 + $0x110] sm:$0xff]
        %v849 = vld [vmem:[%s813 + $0x118] sm:$0xff]
        %v850 = vld [vmem:[%s813 + $0x120] sm:$0xff]
        %v851 = vld [vmem:[%s813 + $0x128] sm:$0xff]
        %v852 = vld [vmem:[%s813 + $0x130] sm:$0xff]
        %v853 = vld [vmem:[%s813 + $0x138] sm:$0xff]
        %v854 = vld [vmem:[%s813 + $0x140] sm:$0xff]
        %v855 = vld [vmem:[%s813 + $0x148] sm:$0xff]
        %v856 = vld [vmem:[%s813 + $0x150] sm:$0xff]
        %v857 = vld [vmem:[%s813 + $0x158] sm:$0xff]
        %v858 = vld [vmem:[%s813 + $0x160] sm:$0xff]
        %v859 = vld [vmem:[%s813 + $0x168] sm:$0xff]
        %v860 = vld [vmem:[%s813 + $0x170] sm:$0xff]
        %v861 = vld [vmem:[%s813 + $0x178] sm:$0xff]
        %v862 = vld [vmem:[%s813 + $0x180] sm:$0xff]
        %v863 = vld [vmem:[%s813 + $0x188] sm:$0xff]
        %v864 = vld [vmem:[%s813 + $0x190] sm:$0xff]
        %v865 = vld [vmem:[%s813 + $0x198] sm:$0xff]
        %v866 = vld [vmem:[%s813 + $0x1a0] sm:$0xff]
        %v867 = vld [vmem:[%s813 + $0x1a8] sm:$0xff]
        %v868 = vld [vmem:[%s813 + $0x1b0] sm:$0xff]
        %v869 = vld [vmem:[%s813 + $0x1b8] sm:$0xff]
        %v870 = vld [vmem:[%s813 + $0x1c0] sm:$0xff]
        %v871 = vld [vmem:[%s813 + $0x1c8] sm:$0xff]
        %v872 = vld [vmem:[%s813 + $0x1d0] sm:$0xff]
        %v873 = vld [vmem:[%s813 + $0x1d8] sm:$0xff]
        %v874 = vld [vmem:[%s813 + $0x1e0] sm:$0xff]
        %v875 = vld [vmem:[%s813 + $0x1e8] sm:$0xff]
        %v876 = vld [vmem:[%s813 + $0x1f0] sm:$0xff]
        %v877 = vld [vmem:[%s813 + $0x1f8] sm:$0xff]
        %v878 = vpack.c.bf16 %v805, %v803
        %v879 = vpack.c.bf16 %v806, %v804
        %v880 = vpack.c.bf16 %v809, %v807
        %v881 = vpack.c.bf16 %v810, %v808
        %v882 = vlaneseq
        %v883 = vshrl.u32 %v882, 7
        %v884 = vsub.s32 2, %v883
        %v885 = vrot.slane %v355, %v884
        %v886 = vlaneseq
        %v887 = vshrl.u32 %v886, 7
        %v888 = vsub.s32 2, %v887
        %v889 = vrot.slane %v356, %v888
        %v890 = vlaneseq
        %v891 = vshrl.u32 %v890, 7
        %v892 = vsub.s32 2, %v891
        %v893 = vrot.slane %v357, %v892
        %v894 = vlaneseq
        %v895 = vshrl.u32 %v894, 7
        %v896 = vsub.s32 2, %v895
        %v897 = vrot.slane %v358, %v896
        %v962 = vunpack.c.l.b16 %v814
        %v963 = vunpack.c.h.b16 %v814
        %v964 = vunpack.c.l.b16 %v815
        %v965 = vunpack.c.h.b16 %v815
        %v966 = vunpack.c.l.b16 %v816
        %v967 = vunpack.c.h.b16 %v816
        %v968 = vunpack.c.l.b16 %v817
        %v969 = vunpack.c.h.b16 %v817
        %v970 = vunpack.c.l.b16 %v818
        %v971 = vunpack.c.h.b16 %v818
        %v972 = vunpack.c.l.b16 %v819
        %v973 = vunpack.c.h.b16 %v819
        %v974 = vunpack.c.l.b16 %v820
        %v975 = vunpack.c.h.b16 %v820
        %v976 = vunpack.c.l.b16 %v821
        %v977 = vunpack.c.h.b16 %v821
        %v978 = vunpack.c.l.b16 %v822
        %v979 = vunpack.c.h.b16 %v822
        %v980 = vunpack.c.l.b16 %v823
        %v981 = vunpack.c.h.b16 %v823
        %v982 = vunpack.c.l.b16 %v824
        %v983 = vunpack.c.h.b16 %v824
        %v984 = vunpack.c.l.b16 %v825
        %v985 = vunpack.c.h.b16 %v825
        %v986 = vunpack.c.l.b16 %v826
        %v987 = vunpack.c.h.b16 %v826
        %v988 = vunpack.c.l.b16 %v827
        %v989 = vunpack.c.h.b16 %v827
        %v990 = vunpack.c.l.b16 %v828
        %v991 = vunpack.c.h.b16 %v828
        %v992 = vunpack.c.l.b16 %v829
        %v993 = vunpack.c.h.b16 %v829
        %v994 = vunpack.c.l.b16 %v830
        %v995 = vunpack.c.h.b16 %v830
        %v996 = vunpack.c.l.b16 %v831
        %v997 = vunpack.c.h.b16 %v831
        %v998 = vunpack.c.l.b16 %v832
        %v999 = vunpack.c.h.b16 %v832
        %v1000 = vunpack.c.l.b16 %v833
        %v1001 = vunpack.c.h.b16 %v833
        %v1002 = vunpack.c.l.b16 %v834
        %v1003 = vunpack.c.h.b16 %v834
        %v1004 = vunpack.c.l.b16 %v835
        %v1005 = vunpack.c.h.b16 %v835
        %v1006 = vunpack.c.l.b16 %v836
        %v1007 = vunpack.c.h.b16 %v836
        %v1008 = vunpack.c.l.b16 %v837
        %v1009 = vunpack.c.h.b16 %v837
        %v1010 = vunpack.c.l.b16 %v838
        %v1011 = vunpack.c.h.b16 %v838
        %v1012 = vunpack.c.l.b16 %v839
        %v1013 = vunpack.c.h.b16 %v839
        %v1014 = vunpack.c.l.b16 %v840
        %v1015 = vunpack.c.h.b16 %v840
        %v1016 = vunpack.c.l.b16 %v841
        %v1017 = vunpack.c.h.b16 %v841
        %v1018 = vunpack.c.l.b16 %v842
        %v1019 = vunpack.c.h.b16 %v842
        %v1020 = vunpack.c.l.b16 %v843
        %v1021 = vunpack.c.h.b16 %v843
        %v1022 = vunpack.c.l.b16 %v844
        %v1023 = vunpack.c.h.b16 %v844
        %v1024 = vunpack.c.l.b16 %v845
        %v1025 = vunpack.c.h.b16 %v845
        %v1026 = vunpack.c.l.b16 %v846
        %v1027 = vunpack.c.h.b16 %v846
        %v1028 = vunpack.c.l.b16 %v847
        %v1029 = vunpack.c.h.b16 %v847
        %v1030 = vunpack.c.l.b16 %v848
        %v1031 = vunpack.c.h.b16 %v848
        %v1032 = vunpack.c.l.b16 %v849
        %v1033 = vunpack.c.h.b16 %v849
        %v1034 = vunpack.c.l.b16 %v850
        %v1035 = vunpack.c.h.b16 %v850
        %v1036 = vunpack.c.l.b16 %v851
        %v1037 = vunpack.c.h.b16 %v851
        %v1038 = vunpack.c.l.b16 %v852
        %v1039 = vunpack.c.h.b16 %v852
        %v1040 = vunpack.c.l.b16 %v853
        %v1041 = vunpack.c.h.b16 %v853
        %v1042 = vunpack.c.l.b16 %v854
        %v1043 = vunpack.c.h.b16 %v854
        %v1044 = vunpack.c.l.b16 %v855
        %v1045 = vunpack.c.h.b16 %v855
        %v1046 = vunpack.c.l.b16 %v856
        %v1047 = vunpack.c.h.b16 %v856
        %v1048 = vunpack.c.l.b16 %v857
        %v1049 = vunpack.c.h.b16 %v857
        %v1050 = vunpack.c.l.b16 %v858
        %v1051 = vunpack.c.h.b16 %v858
        %v1052 = vunpack.c.l.b16 %v859
        %v1053 = vunpack.c.h.b16 %v859
        %v1054 = vunpack.c.l.b16 %v860
        %v1055 = vunpack.c.h.b16 %v860
        %v1056 = vunpack.c.l.b16 %v861
        %v1057 = vunpack.c.h.b16 %v861
        %v1058 = vunpack.c.l.b16 %v862
        %v1059 = vunpack.c.h.b16 %v862
        %v1060 = vunpack.c.l.b16 %v863
        %v1061 = vunpack.c.h.b16 %v863
        %v1062 = vunpack.c.l.b16 %v864
        %v1063 = vunpack.c.h.b16 %v864
        %v1064 = vunpack.c.l.b16 %v865
        %v1065 = vunpack.c.h.b16 %v865
        %v1066 = vunpack.c.l.b16 %v866
        %v1067 = vunpack.c.h.b16 %v866
        %v1068 = vunpack.c.l.b16 %v867
        %v1069 = vunpack.c.h.b16 %v867
        %v1070 = vunpack.c.l.b16 %v868
        %v1071 = vunpack.c.h.b16 %v868
        %v1072 = vunpack.c.l.b16 %v869
        %v1073 = vunpack.c.h.b16 %v869
        %v1074 = vunpack.c.l.b16 %v870
        %v1075 = vunpack.c.h.b16 %v870
        %v1076 = vunpack.c.l.b16 %v871
        %v1077 = vunpack.c.h.b16 %v871
        %v1078 = vunpack.c.l.b16 %v872
        %v1079 = vunpack.c.h.b16 %v872
        %v1080 = vunpack.c.l.b16 %v873
        %v1081 = vunpack.c.h.b16 %v873
        %v1082 = vunpack.c.l.b16 %v874
        %v1083 = vunpack.c.h.b16 %v874
        %v1084 = vunpack.c.l.b16 %v875
        %v1085 = vunpack.c.h.b16 %v875
        %v1086 = vunpack.c.l.b16 %v876
        %v1087 = vunpack.c.h.b16 %v876
        %v1088 = vunpack.c.l.b16 %v877
        %v1089 = vunpack.c.h.b16 %v877
        %v1090 = vpack.c.b16 %v966, %v962
        %v1091 = vpack.c.b16 %v967, %v963
        %v1092 = vpack.c.b16 %v968, %v964
        %v1093 = vpack.c.b16 %v969, %v965
        %v1094 = vpack.c.b16 %v974, %v970
        %v1095 = vpack.c.b16 %v975, %v971
        %v1096 = vpack.c.b16 %v976, %v972
        %v1097 = vpack.c.b16 %v977, %v973
        %v1098 = vpack.c.b16 %v982, %v978
        %v1099 = vpack.c.b16 %v983, %v979
        %v1100 = vpack.c.b16 %v984, %v980
        %v1101 = vpack.c.b16 %v985, %v981
        %v1102 = vpack.c.b16 %v990, %v986
        %v1103 = vpack.c.b16 %v991, %v987
        %v1104 = vpack.c.b16 %v992, %v988
        %v1105 = vpack.c.b16 %v993, %v989
        %v1106 = vpack.c.b16 %v998, %v994
        %v1107 = vpack.c.b16 %v999, %v995
        %v1108 = vpack.c.b16 %v1000, %v996
        %v1109 = vpack.c.b16 %v1001, %v997
        %v1110 = vpack.c.b16 %v1006, %v1002
        %v1111 = vpack.c.b16 %v1007, %v1003
        %v1112 = vpack.c.b16 %v1008, %v1004
        %v1113 = vpack.c.b16 %v1009, %v1005
        %v1114 = vpack.c.b16 %v1014, %v1010
        %v1115 = vpack.c.b16 %v1015, %v1011
        %v1116 = vpack.c.b16 %v1016, %v1012
        %v1117 = vpack.c.b16 %v1017, %v1013
        %v1118 = vpack.c.b16 %v1022, %v1018
        %v1119 = vpack.c.b16 %v1023, %v1019
        %v1120 = vpack.c.b16 %v1024, %v1020
        %v1121 = vpack.c.b16 %v1025, %v1021
        %v1122 = vpack.c.b16 %v1030, %v1026
        %v1123 = vpack.c.b16 %v1031, %v1027
        %v1124 = vpack.c.b16 %v1032, %v1028
        %v1125 = vpack.c.b16 %v1033, %v1029
        %v1126 = vpack.c.b16 %v1038, %v1034
        %v1127 = vpack.c.b16 %v1039, %v1035
        %v1128 = vpack.c.b16 %v1040, %v1036
        %v1129 = vpack.c.b16 %v1041, %v1037
        %v1130 = vpack.c.b16 %v1046, %v1042
        %v1131 = vpack.c.b16 %v1047, %v1043
        %v1132 = vpack.c.b16 %v1048, %v1044
        %v1133 = vpack.c.b16 %v1049, %v1045
        %v1134 = vpack.c.b16 %v1054, %v1050
        %v1135 = vpack.c.b16 %v1055, %v1051
        %v1136 = vpack.c.b16 %v1056, %v1052
        %v1137 = vpack.c.b16 %v1057, %v1053
        %v1138 = vpack.c.b16 %v1062, %v1058
        %v1139 = vpack.c.b16 %v1063, %v1059
        %v1140 = vpack.c.b16 %v1064, %v1060
        %v1141 = vpack.c.b16 %v1065, %v1061
        %v1142 = vpack.c.b16 %v1070, %v1066
        %v1143 = vpack.c.b16 %v1071, %v1067
        %v1144 = vpack.c.b16 %v1072, %v1068
        %v1145 = vpack.c.b16 %v1073, %v1069
        %v1146 = vpack.c.b16 %v1078, %v1074
        %v1147 = vpack.c.b16 %v1079, %v1075
        %v1148 = vpack.c.b16 %v1080, %v1076
        %v1149 = vpack.c.b16 %v1081, %v1077
        %v1150 = vpack.c.b16 %v1086, %v1082
        %v1151 = vpack.c.b16 %v1087, %v1083
        %v1152 = vpack.c.b16 %v1088, %v1084
        %v1153 = vpack.c.b16 %v1089, %v1085
        %1218 = vmatprep.subr.bf16.mxu0 %v1091
        %1219 = vmatpush1.bf16.msra.mxu0 %v1090
        %1220 = vmatprep.subr.bf16.mxu0 %v1095
        %1221 = vmatpush1.bf16.msra.mxu0 %v1094
        %1222 = vmatprep.subr.bf16.mxu0 %v1099
        %1223 = vmatpush1.bf16.msra.mxu0 %v1098
        %1224 = vmatprep.subr.bf16.mxu0 %v1103
        %1225 = vmatpush1.bf16.msra.mxu0 %v1102
        %1226 = vmatprep.subr.bf16.mxu0 %v1107
        %1227 = vmatpush1.bf16.msra.mxu0 %v1106
        %1228 = vmatprep.subr.bf16.mxu0 %v1111
        %1229 = vmatpush1.bf16.msra.mxu0 %v1110
        %1230 = vmatprep.subr.bf16.mxu0 %v1115
        %1231 = vmatpush1.bf16.msra.mxu0 %v1114
        %1232 = vmatprep.subr.bf16.mxu0 %v1119
        %1233 = vmatpush1.bf16.msra.mxu0 %v1118
        %1234 = vmatprep.subr.bf16.mxu0 %v1123
        %1235 = vmatpush1.bf16.msra.mxu0 %v1122
        %1236 = vmatprep.subr.bf16.mxu0 %v1127
        %1237 = vmatpush1.bf16.msra.mxu0 %v1126
        %1238 = vmatprep.subr.bf16.mxu0 %v1131
        %1239 = vmatpush1.bf16.msra.mxu0 %v1130
        %1240 = vmatprep.subr.bf16.mxu0 %v1135
        %1241 = vmatpush1.bf16.msra.mxu0 %v1134
        %1242 = vmatprep.subr.bf16.mxu0 %v1139
        %1243 = vmatpush1.bf16.msra.mxu0 %v1138
        %1244 = vmatprep.subr.bf16.mxu0 %v1143
        %1245 = vmatpush1.bf16.msra.mxu0 %v1142
        %1246 = vmatprep.subr.bf16.mxu0 %v1147
        %1247 = vmatpush1.bf16.msra.mxu0 %v1146
        %1248 = vmatprep.subr.bf16.mxu0 %v1151
        %1249 = vmatpush1.bf16.msra.mxu0 %v1150
        %1250 = vmatprep.mubr.bf16.mxu0 %v879
        %1251 = vmatmul.mubr.bf16.gmra.mrb[0].mxu0 %v878
        %v1252 = vpop.f32.mrb[0].mxu0
        %v1253 = vadd.f32 %v885, %v1252
        %v1254 = vpop.f32.mrb[0].mxu0
        %v1255 = vadd.f32 %v889, %v1254
        %v1256 = vpop.f32.mrb[0].mxu0
        %v1257 = vadd.f32 %v885, %v1256
        %v1258 = vpop.f32.mrb[0].mxu0
        %v1259 = vadd.f32 %v889, %v1258
        %1260 = vmatprep.mubr.bf16.mxu0 %v881
        %1261 = vmatmul.mubr.bf16.gmra.mrb[0].mxu0 %v880
        %v1262 = vpop.f32.mrb[0].mxu0
        %v1263 = vadd.f32 %v885, %v1262
        %v1264 = vpop.f32.mrb[0].mxu0
        %v1265 = vadd.f32 %v889, %v1264
        %v1266 = vpop.f32.mrb[0].mxu0
        %v1267 = vadd.f32 %v885, %v1266
        %v1268 = vpop.f32.mrb[0].mxu0
        %v1269 = vadd.f32 %v889, %v1268
        %1270 = vdwg.mxu0
        %1271 = vmatprep.subr.bf16.mxu0 %v1093
        %1272 = vmatpush1.bf16.msra.mxu0 %v1092
        %1273 = vmatprep.subr.bf16.mxu0 %v1097
        %1274 = vmatpush1.bf16.msra.mxu0 %v1096
        %1275 = vmatprep.subr.bf16.mxu0 %v1101
        %1276 = vmatpush1.bf16.msra.mxu0 %v1100
        %1277 = vmatprep.subr.bf16.mxu0 %v1105
        %1278 = vmatpush1.bf16.msra.mxu0 %v1104
        %1279 = vmatprep.subr.bf16.mxu0 %v1109
        %1280 = vmatpush1.bf16.msra.mxu0 %v1108
        %1281 = vmatprep.subr.bf16.mxu0 %v1113
        %1282 = vmatpush1.bf16.msra.mxu0 %v1112
        %1283 = vmatprep.subr.bf16.mxu0 %v1117
        %1284 = vmatpush1.bf16.msra.mxu0 %v1116
        %1285 = vmatprep.subr.bf16.mxu0 %v1121
        %1286 = vmatpush1.bf16.msra.mxu0 %v1120
        %1287 = vmatprep.subr.bf16.mxu0 %v1125
        %1288 = vmatpush1.bf16.msra.mxu0 %v1124
        %1289 = vmatprep.subr.bf16.mxu0 %v1129
        %1290 = vmatpush1.bf16.msra.mxu0 %v1128
        %1291 = vmatprep.subr.bf16.mxu0 %v1133
        %1292 = vmatpush1.bf16.msra.mxu0 %v1132
        %1293 = vmatprep.subr.bf16.mxu0 %v1137
        %1294 = vmatpush1.bf16.msra.mxu0 %v1136
        %1295 = vmatprep.subr.bf16.mxu0 %v1141
        %1296 = vmatpush1.bf16.msra.mxu0 %v1140
        %1297 = vmatprep.subr.bf16.mxu0 %v1145
        %1298 = vmatpush1.bf16.msra.mxu0 %v1144
        %1299 = vmatprep.subr.bf16.mxu0 %v1149
        %1300 = vmatpush1.bf16.msra.mxu0 %v1148
        %1301 = vmatprep.subr.bf16.mxu0 %v1153
        %1302 = vmatpush1.bf16.msra.mxu0 %v1152
        %1303 = vmatprep.mubr.bf16.mxu0 %v879
        %1304 = vmatmul.mubr.bf16.gmra.mrb[0].mxu0 %v878
        %v1305 = vpop.f32.mrb[0].mxu0
        %v1306 = vadd.f32 %v893, %v1305
        %v1307 = vpop.f32.mrb[0].mxu0
        %v1308 = vadd.f32 %v897, %v1307
        %v1309 = vpop.f32.mrb[0].mxu0
        %v1310 = vadd.f32 %v893, %v1309
        %v1311 = vpop.f32.mrb[0].mxu0
        %v1312 = vadd.f32 %v897, %v1311
        %1313 = vmatprep.mubr.bf16.mxu0 %v881
        %1314 = vmatmul.mubr.bf16.gmra.mrb[0].mxu0 %v880
        %v1315 = vpop.f32.mrb[0].mxu0
        %v1316 = vadd.f32 %v893, %v1315
        %v1317 = vpop.f32.mrb[0].mxu0
        %v1318 = vadd.f32 %v897, %v1317
        %v1319 = vpop.f32.mrb[0].mxu0
        %v1320 = vadd.f32 %v893, %v1319
        %v1321 = vpop.f32.mrb[0].mxu0
        %v1322 = vadd.f32 %v897, %v1321
        %1323 = vdwg.mxu0
        %v1324 = vsub.f32 %v1253, %v1306
        %v1325 = vsub.f32 %v1255, %v1308
        %v1326 = vsub.f32 %v1257, %v1310
        %v1327 = vsub.f32 %v1259, %v1312
        %v1328 = vsub.f32 %v1263, %v1316
        %v1329 = vsub.f32 %v1265, %v1318
        %v1330 = vsub.f32 %v1267, %v1320
        %v1331 = vsub.f32 %v1269, %v1322
        %v1332 = vmul.f32 %v1324, %v1324
        %v1333 = vmul.f32 %v1325, %v1325
        %v1334 = vmul.f32 %v1326, %v1326
        %v1335 = vmul.f32 %v1327, %v1327
        %v1336 = vmul.f32 %v1328, %v1328
        %v1337 = vmul.f32 %v1329, %v1329
        %v1338 = vmul.f32 %v1330, %v1330
        %v1339 = vmul.f32 %v1331, %v1331
        %v1340 = vpack.c.bf16 %v1334, %v1332
        %v1341 = vpack.c.bf16 %v1335, %v1333
        %v1342 = vpack.c.bf16 %v1338, %v1336
        %v1343 = vpack.c.bf16 %v1339, %v1337
        %v1344 = vld [vmem:[#allocation13] sm:$0xff]
        %v1345 = vld [vmem:[#allocation13 + $0x8] sm:$0xff]
        %v1346 = vld [vmem:[#allocation13 + $0x10] sm:$0xff]
        %v1347 = vld [vmem:[#allocation13 + $0x18] sm:$0xff]
        %v1348 = vld [vmem:[#allocation13 + $0x20] sm:$0xff]
        %v1349 = vld [vmem:[#allocation13 + $0x28] sm:$0xff]
        %v1350 = vld [vmem:[#allocation13 + $0x30] sm:$0xff]
        %v1351 = vld [vmem:[#allocation13 + $0x38] sm:$0xff]
        %v1352 = vld [vmem:[#allocation13 + $0x40] sm:$0xff]
        %v1353 = vld [vmem:[#allocation13 + $0x48] sm:$0xff]
        %v1354 = vld [vmem:[#allocation13 + $0x50] sm:$0xff]
        %v1355 = vld [vmem:[#allocation13 + $0x58] sm:$0xff]
        %v1356 = vld [vmem:[#allocation13 + $0x60] sm:$0xff]
        %v1357 = vld [vmem:[#allocation13 + $0x68] sm:$0xff]
        %v1358 = vld [vmem:[#allocation13 + $0x70] sm:$0xff]
        %v1359 = vld [vmem:[#allocation13 + $0x78] sm:$0xff]
        %v1360 = vld [vmem:[#allocation13 + $0x80] sm:$0xff]
        %v1361 = vld [vmem:[#allocation13 + $0x88] sm:$0xff]
        %v1362 = vld [vmem:[#allocation13 + $0x90] sm:$0xff]
        %v1363 = vld [vmem:[#allocation13 + $0x98] sm:$0xff]
        %v1364 = vld [vmem:[#allocation13 + $0xa0] sm:$0xff]
        %v1365 = vld [vmem:[#allocation13 + $0xa8] sm:$0xff]
        %v1366 = vld [vmem:[#allocation13 + $0xb0] sm:$0xff]
        %v1367 = vld [vmem:[#allocation13 + $0xb8] sm:$0xff]
        %v1368 = vld [vmem:[#allocation13 + $0xc0] sm:$0xff]
        %v1369 = vld [vmem:[#allocation13 + $0xc8] sm:$0xff]
        %v1370 = vld [vmem:[#allocation13 + $0xd0] sm:$0xff]
        %v1371 = vld [vmem:[#allocation13 + $0xd8] sm:$0xff]
        %v1372 = vld [vmem:[#allocation13 + $0xe0] sm:$0xff]
        %v1373 = vld [vmem:[#allocation13 + $0xe8] sm:$0xff]
        %v1374 = vld [vmem:[#allocation13 + $0xf0] sm:$0xff]
        %v1375 = vld [vmem:[#allocation13 + $0xf8] sm:$0xff]
        %v1408 = vunpack.c.l.b16 %v1344
        %v1409 = vunpack.c.h.b16 %v1344
        %v1410 = vunpack.c.l.b16 %v1345
        %v1411 = vunpack.c.h.b16 %v1345
        %v1412 = vunpack.c.l.b16 %v1346
        %v1413 = vunpack.c.h.b16 %v1346
        %v1414 = vunpack.c.l.b16 %v1347
        %v1415 = vunpack.c.h.b16 %v1347
        %v1416 = vunpack.c.l.b16 %v1348
        %v1417 = vunpack.c.h.b16 %v1348
        %v1418 = vunpack.c.l.b16 %v1349
        %v1419 = vunpack.c.h.b16 %v1349
        %v1420 = vunpack.c.l.b16 %v1350
        %v1421 = vunpack.c.h.b16 %v1350
        %v1422 = vunpack.c.l.b16 %v1351
        %v1423 = vunpack.c.h.b16 %v1351
        %v1424 = vunpack.c.l.b16 %v1352
        %v1425 = vunpack.c.h.b16 %v1352
        %v1426 = vunpack.c.l.b16 %v1353
        %v1427 = vunpack.c.h.b16 %v1353
        %v1428 = vunpack.c.l.b16 %v1354
        %v1429 = vunpack.c.h.b16 %v1354
        %v1430 = vunpack.c.l.b16 %v1355
        %v1431 = vunpack.c.h.b16 %v1355
        %v1432 = vunpack.c.l.b16 %v1356
        %v1433 = vunpack.c.h.b16 %v1356
        %v1434 = vunpack.c.l.b16 %v1357
        %v1435 = vunpack.c.h.b16 %v1357
        %v1436 = vunpack.c.l.b16 %v1358
        %v1437 = vunpack.c.h.b16 %v1358
        %v1438 = vunpack.c.l.b16 %v1359
        %v1439 = vunpack.c.h.b16 %v1359
        %v1440 = vunpack.c.l.b16 %v1360
        %v1441 = vunpack.c.h.b16 %v1360
        %v1442 = vunpack.c.l.b16 %v1361
        %v1443 = vunpack.c.h.b16 %v1361
        %v1444 = vunpack.c.l.b16 %v1362
        %v1445 = vunpack.c.h.b16 %v1362
        %v1446 = vunpack.c.l.b16 %v1363
        %v1447 = vunpack.c.h.b16 %v1363
        %v1448 = vunpack.c.l.b16 %v1364
        %v1449 = vunpack.c.h.b16 %v1364
        %v1450 = vunpack.c.l.b16 %v1365
        %v1451 = vunpack.c.h.b16 %v1365
        %v1452 = vunpack.c.l.b16 %v1366
        %v1453 = vunpack.c.h.b16 %v1366
        %v1454 = vunpack.c.l.b16 %v1367
        %v1455 = vunpack.c.h.b16 %v1367
        %v1456 = vunpack.c.l.b16 %v1368
        %v1457 = vunpack.c.h.b16 %v1368
        %v1458 = vunpack.c.l.b16 %v1369
        %v1459 = vunpack.c.h.b16 %v1369
        %v1460 = vunpack.c.l.b16 %v1370
        %v1461 = vunpack.c.h.b16 %v1370
        %v1462 = vunpack.c.l.b16 %v1371
        %v1463 = vunpack.c.h.b16 %v1371
        %v1464 = vunpack.c.l.b16 %v1372
        %v1465 = vunpack.c.h.b16 %v1372
        %v1466 = vunpack.c.l.b16 %v1373
        %v1467 = vunpack.c.h.b16 %v1373
        %v1468 = vunpack.c.l.b16 %v1374
        %v1469 = vunpack.c.h.b16 %v1374
        %v1470 = vunpack.c.l.b16 %v1375
        %v1471 = vunpack.c.h.b16 %v1375
        %v1472 = vpack.c.b16 %v1410, %v1408
        %v1473 = vpack.c.b16 %v1411, %v1409
        %v1474 = vpack.c.b16 %v1414, %v1412
        %v1475 = vpack.c.b16 %v1415, %v1413
        %v1476 = vpack.c.b16 %v1418, %v1416
        %v1477 = vpack.c.b16 %v1419, %v1417
        %v1478 = vpack.c.b16 %v1422, %v1420
        %v1479 = vpack.c.b16 %v1423, %v1421
        %v1480 = vpack.c.b16 %v1426, %v1424
        %v1481 = vpack.c.b16 %v1427, %v1425
        %v1482 = vpack.c.b16 %v1430, %v1428
        %v1483 = vpack.c.b16 %v1431, %v1429
        %v1484 = vpack.c.b16 %v1434, %v1432
        %v1485 = vpack.c.b16 %v1435, %v1433
        %v1486 = vpack.c.b16 %v1438, %v1436
        %v1487 = vpack.c.b16 %v1439, %v1437
        %v1488 = vpack.c.b16 %v1442, %v1440
        %v1489 = vpack.c.b16 %v1443, %v1441
        %v1490 = vpack.c.b16 %v1446, %v1444
        %v1491 = vpack.c.b16 %v1447, %v1445
        %v1492 = vpack.c.b16 %v1450, %v1448
        %v1493 = vpack.c.b16 %v1451, %v1449
        %v1494 = vpack.c.b16 %v1454, %v1452
        %v1495 = vpack.c.b16 %v1455, %v1453
        %v1496 = vpack.c.b16 %v1458, %v1456
        %v1497 = vpack.c.b16 %v1459, %v1457
        %v1498 = vpack.c.b16 %v1462, %v1460
        %v1499 = vpack.c.b16 %v1463, %v1461
        %v1500 = vpack.c.b16 %v1466, %v1464
        %v1501 = vpack.c.b16 %v1467, %v1465
        %v1502 = vpack.c.b16 %v1470, %v1468
        %v1503 = vpack.c.b16 %v1471, %v1469
        %1536 = vmatprep.subr.bf16.mxu0 %v1473
        %1537 = vmatpush1.bf16.msra.mxu0 %v1472
        %1538 = vmatprep.subr.bf16.mxu0 %v1475
        %1539 = vmatpush1.bf16.msra.mxu0 %v1474
        %1540 = vmatprep.subr.bf16.mxu0 %v1477
        %1541 = vmatpush1.bf16.msra.mxu0 %v1476
        %1542 = vmatprep.subr.bf16.mxu0 %v1479
        %1543 = vmatpush1.bf16.msra.mxu0 %v1478
        %1544 = vmatprep.subr.bf16.mxu0 %v1481
        %1545 = vmatpush1.bf16.msra.mxu0 %v1480
        %1546 = vmatprep.subr.bf16.mxu0 %v1483
        %1547 = vmatpush1.bf16.msra.mxu0 %v1482
        %1548 = vmatprep.subr.bf16.mxu0 %v1485
        %1549 = vmatpush1.bf16.msra.mxu0 %v1484
        %1550 = vmatprep.subr.bf16.mxu0 %v1487
        %1551 = vmatpush1.bf16.msra.mxu0 %v1486
        %1552 = vmatprep.subr.bf16.mxu0 %v1489
        %1553 = vmatpush1.bf16.msra.mxu0 %v1488
        %1554 = vmatprep.subr.bf16.mxu0 %v1491
        %1555 = vmatpush1.bf16.msra.mxu0 %v1490
        %1556 = vmatprep.subr.bf16.mxu0 %v1493
        %1557 = vmatpush1.bf16.msra.mxu0 %v1492
        %1558 = vmatprep.subr.bf16.mxu0 %v1495
        %1559 = vmatpush1.bf16.msra.mxu0 %v1494
        %1560 = vmatprep.subr.bf16.mxu0 %v1497
        %1561 = vmatpush1.bf16.msra.mxu0 %v1496
        %1562 = vmatprep.subr.bf16.mxu0 %v1499
        %1563 = vmatpush1.bf16.msra.mxu0 %v1498
        %1564 = vmatprep.subr.bf16.mxu0 %v1501
        %1565 = vmatpush1.bf16.msra.mxu0 %v1500
        %1566 = vmatprep.subr.bf16.mxu0 %v1503
        %1567 = vmatpush1.bf16.msra.mxu0 %v1502
        %1568 = vmatprep.mubr.bf16.mxu0 %v1341
        %1569 = vmatmul.mubr.bf16.gmra.mrb[0].mxu0 %v1340
        %v1570 = vpop.f32.mrb[0].mxu0
        %v1571 = vadd.f32 1e-05, %v1570
        %v1572 = vpop.f32.mrb[0].mxu0
        %v1573 = vadd.f32 1e-05, %v1572
        %v1574 = vpop.f32.mrb[0].mxu0
        %v1575 = vadd.f32 1e-05, %v1574
        %v1576 = vpop.f32.mrb[0].mxu0
        %v1577 = vadd.f32 1e-05, %v1576
        %1578 = vmatprep.mubr.bf16.mxu0 %v1343
        %1579 = vmatmul.mubr.bf16.gmra.mrb[0].mxu0 %v1342
        %v1580 = vpop.f32.mrb[0].mxu0
        %v1581 = vadd.f32 1e-05, %v1580
        %v1582 = vpop.f32.mrb[0].mxu0
        %v1583 = vadd.f32 1e-05, %v1582
        %v1584 = vpop.f32.mrb[0].mxu0
        %v1585 = vadd.f32 1e-05, %v1584
        %v1586 = vpop.f32.mrb[0].mxu0
        %v1587 = vadd.f32 1e-05, %v1586
        %1588 = vdwg.mxu0
        %v1589 = vrsqrt.pop %v1571
        %v1590 = vrsqrt.pop %v1573
        %v1591 = vrsqrt.pop %v1575
        %v1592 = vrsqrt.pop %v1577
        %v1593 = vrsqrt.pop %v1581
        %v1594 = vrsqrt.pop %v1583
        %v1595 = vrsqrt.pop %v1585
        %v1596 = vrsqrt.pop %v1587
        %v1597 = vmul.f32 %v1324, %v1589
        %v1598 = vmul.f32 %v1325, %v1590
        %v1599 = vmul.f32 %v1326, %v1591
        %v1600 = vmul.f32 %v1327, %v1592
        %v1601 = vmul.f32 %v1328, %v1593
        %v1602 = vmul.f32 %v1329, %v1594
        %v1603 = vmul.f32 %v1330, %v1595
        %v1604 = vmul.f32 %v1331, %v1596
        %v1605 = vlaneseq
        %v1606 = vshrl.u32 %v1605, 7
        %v1607 = vsub.s32 3, %v1606
        %v1608 = vrot.slane %v355, %v1607
        %v1609 = vlaneseq
        %v1610 = vshrl.u32 %v1609, 7
        %v1611 = vsub.s32 3, %v1610
        %v1612 = vrot.slane %v356, %v1611
        %v1613 = vmul.f32 %v1597, %v1608
        %v1614 = vmul.f32 %v1598, %v1612
        %v1615 = vmul.f32 %v1599, %v1608
        %v1616 = vmul.f32 %v1600, %v1612
        %v1617 = vmul.f32 %v1601, %v1608
        %v1618 = vmul.f32 %v1602, %v1612
        %v1619 = vmul.f32 %v1603, %v1608
        %v1620 = vmul.f32 %v1604, %v1612
        %v1621 = vlaneseq
        %v1622 = vshrl.u32 %v1621, 7
        %v1623 = vsub.s32 4, %v1622
        %v1624 = vrot.slane %v355, %v1623
        %v1625 = vlaneseq
        %v1626 = vshrl.u32 %v1625, 7
        %v1627 = vsub.s32 4, %v1626
        %v1628 = vrot.slane %v356, %v1627
        %v1629 = vadd.f32 %v1613, %v1624
        %v1630 = vadd.f32 %v1614, %v1628
        %v1631 = vadd.f32 %v1615, %v1624
        %v1632 = vadd.f32 %v1616, %v1628
        %v1633 = vadd.f32 %v1617, %v1624
        %v1634 = vadd.f32 %v1618, %v1628
        %v1635 = vadd.f32 %v1619, %v1624
        %v1636 = vadd.f32 %v1620, %v1628
        %v1637 = vpack.c.bf16 %v1631, %v1629
        %v1638 = vpack.c.bf16 %v1632, %v1630
        %v1639 = vpack.c.bf16 %v1635, %v1633
        %v1640 = vpack.c.bf16 %v1636, %v1634
        %v1645 = vunpack.c.l.b16 %v1637
        %v1646 = vunpack.c.l.b16 %v1638
        %v1647 = vunpack.c.h.b16 %v1637
        %v1648 = vunpack.c.h.b16 %v1638
        %v1649 = vunpack.c.l.b16 %v1639
        %v1650 = vunpack.c.l.b16 %v1640
        %v1651 = vunpack.c.h.b16 %v1639
        %v1652 = vunpack.c.h.b16 %v1640
        %v1653 = vpack.c.b16 %v1646, %v1645
        %v1654 = vpack.c.b16 %v1648, %v1647
        %v1655 = vpack.c.b16 %v1650, %v1649
        %v1656 = vpack.c.b16 %v1652, %v1651
        %1661 = vst [vmem:[%s347] sm:$0xff] %v1653
        %1662 = vst [vmem:[%s347 + $0x8] sm:$0xff] %v1654
        %1663 = vst [vmem:[%s347 + $0x10] sm:$0xff] %v1655
        %1664 = vst [vmem:[%s347 + $0x18] sm:$0xff] %v1656
        %s1665 = sand.u32 %s170, 1
        %s1666 = scalar_lea.sflag [#allocation6], %s1665
        %s1667 = sand.u32 %s170, 1
        %s1668 = smul.addr %s1667, 32
        %s1669 = scalar_lea.vmem [#allocation15], %s1668
        // Predicated region
        $region69: #{tpu_custom_call.1} parent=43 // pred_check
          %p1670 = pneg %p180
        $region70: #{tpu_custom_call.1} parent=43 // pred_check_branch
          %1672 = sbr.rel (%p1670) target = $region72
        $region71: #{tpu_custom_call.1} parent=43 // pred_region
          %s1673 = smul.u32 4, %s31
          %s1675 = ssub.s32 512, 512
          %1676 = vsyncadd %s1666, %s1675
          %s1677 = smul.addr %s1673, 2
          %s1678 = smul.addr %s1677, 64
          %s1679 = scalar_lea.hbm %s7, %s1678
          %s1680 = sshll.u32 %s1669, 4
          %s1681 = int_to_ptr.vmem [resolvable:$true] %s1680
          %1686 = dma.vmem_to_hbm [thread:$0]  %s1681, 512, %s1679, %s1666, 128, 128, 8
        $region72: #{tpu_custom_call.1} parent=43 // pred_fallthru
          _
      $region44: #{tpu_custom_call.1} parent=5 // pred_fallthru
        _
      %p1687 = scmp.le.s32.totalorder 2, %s26
      // Predicated region
      $region73: #{tpu_custom_call.1} parent=5 // pred_check
        %p1688 = pneg %p1687
      $region74: #{tpu_custom_call.1} parent=5 // pred_check_branch
        %1690 = sbr.rel (%p1688) target = $region76
      $region75: #{tpu_custom_call.1} parent=5 // pred_region
        %s1691 = ssub.s32 %s26, 2
        // Predicated region
        $region77: #{tpu_custom_call.1} parent=75 // pred_check
          %p1692 = pneg %p186
        $region78: #{tpu_custom_call.1} parent=75 // pred_check_branch
          %1694 = sbr.rel (%p1692) target = $region80
        $region79: #{tpu_custom_call.1} parent=75 // pred_region
          %s1695 = sand.u32 %s171, 1
          %s1696 = scalar_lea.sflag [#allocation6], %s1695
          %s1697 = sand.u32 %s171, 1
          %s1698 = smul.addr %s1697, 32
          %s1699 = scalar_lea.vmem [#allocation15], %s1698
          %1700 = dma.done %s1696, 512
        $region80: #{tpu_custom_call.1} parent=75 // pred_fallthru
          _
      $region76: #{tpu_custom_call.1} parent=5 // pred_fallthru
        _
    $region6: #{tpu_custom_call.1} parent=1 // loop_footer
      %s30 = sadd.s32 1, %s26
    $region7: #{tpu_custom_call.1} parent=1 // loop_footer_branch
      %25 = sbr.rel target = $region3
    $region8: #{tpu_custom_call.1} parent=1 // loop_exit
      _
    %1701 = vsyncpa [#allocation5], 1
    %s1702 = scalar_lea.sflag [#allocation5], 1
    %1703 = vsyncpa %s1702, 1
    %1704 = vsyncpa [#allocation8], 1
    %1705 = vsyncpa [#allocation11], 1
    %1706 = vsyncpa [#allocation14], 1
    %1707 = vsyncpa [#allocation6], 1
    %s1708 = scalar_lea.sflag [#allocation6], 1
    %1709 = vsyncpa %s1708, 1

</llo_original>
